<compile_context>
chip_gen: v6e
topology: v6e:2x2x1
jax: 0.10.0
libtpu: 0.0.40
codegen_flags: <defaults>
</compile_context>

<pallas_src>
import jax
import jax.numpy as jnp
from jax import lax
from jax.experimental import pallas as pl
from jax.experimental.pallas import tpu as pltpu

NEG_INF = -1e30   # bias for padded vocab lanes: exp() underflows to 0, no NaN/inf
GATE = 128        # per-direction fused gate width (3H = 96 padded to 128 lanes)


def _round_up(x, m):
    return ((x + m - 1) // m) * m


def _vmem():
    return pl.BlockSpec(memory_space=pltpu.MemorySpace.VMEM)


def _unroll_for(T):
    # Full unroll only for short sequences; partial unroll keeps LLO visibility
    # without instruction-stream blowup at realistic SMILES lengths.
    return True if T <= 16 else 4


# ----------------------------------------------------------------------------
# Kernel 1: bidirectional encoder GRU -> final hidden states (2, B, H)
#   - one hoisted (T*B, E) @ (E, 2*GATE) input projection for BOTH directions
#   - recurrence: stacked h = [h_f | h_b], block-diagonal Wh (2H, 2*GATE)
#     => ONE matmul per serial step; single sigmoid over [r|z] per direction
#   PyTorch GRU gate order/semantics (r, z, n):
#     gx = x @ Wi + bi + [bh_r, bh_z, 0]   (precomputed, all timesteps)
#     gh = h @ Wh                           (in-loop, no bias)
#     n  = tanh(gx_n + r * (gh_n + bh_n));  h' = n + z*(h - n)
# ----------------------------------------------------------------------------
def encoder_bigru_kernel(emb_ref, wi_ref, wh_ref, bx_ref, bhn_ref,
                         hout_ref, gxf_ref, gxb_ref):
    B = hout_ref.shape[1]
    H = hout_ref.shape[2]
    T = emb_ref.shape[0] // B
    G = gxf_ref.shape[1]

    # Hoisted input projection for ALL timesteps, both directions: one matmul.
    gx = (jnp.dot(emb_ref[...], wi_ref[...], preferred_element_type=jnp.float32)
          + bx_ref[...])                                  # (T*B, 2G)
    gxf_ref[...] = gx[:, :G]                              # fwd gates, time order
    gxb_ref[...] = gx[:, G:]                              # bwd gates, time order

    wh = wh_ref[...]                                      # (2H, 2G) block-diagonal
    bhn = jnp.broadcast_to(bhn_ref[...], (B, 2 * H))      # hoisted broadcast
    bhn_f = bhn[:, :H]
    bhn_b = bhn[:, H:]

    h0 = jnp.zeros((B, 2 * H), jnp.float32)               # [h_f | h_b]

    def step(t, h):
        gh = jnp.dot(h, wh, preferred_element_type=jnp.float32)   # ONE MXU push
        i_f = pl.multiple_of(t * B, 8)
        i_b = pl.multiple_of((T - 1 - t) * B, 8)
        gx_f = gxf_ref[pl.ds(i_f, B), :]                  # (B, G) lane-dense
        gx_b = gxb_ref[pl.ds(i_b, B), :]
        # forward direction
        rz_f = jax.nn.sigmoid(gx_f[:, :2 * H] + gh[:, :2 * H])    # one sigmoid
        n_f = jnp.tanh(gx_f[:, 2 * H:3 * H]
                       + rz_f[:, :H] * (gh[:, 2 * H:3 * H] + bhn_f))
        h_f = n_f + rz_f[:, H:2 * H] * (h[:, :H] - n_f)
        # backward direction
        rz_b = jax.nn.sigmoid(gx_b[:, :2 * H] + gh[:, G:G + 2 * H])
        n_b = jnp.tanh(gx_b[:, 2 * H:3 * H]
                       + rz_b[:, :H] * (gh[:, G + 2 * H:G + 3 * H] + bhn_b))
        h_b = n_b + rz_b[:, H:2 * H] * (h[:, H:] - n_b)
        return jnp.concatenate([h_f, h_b], axis=1)

    h_fin = lax.fori_loop(0, T, step, h0, unroll=_unroll_for(T))
    hout_ref[0] = h_fin[:, :H]
    hout_ref[1] = h_fin[:, H:]


# ----------------------------------------------------------------------------
# Kernel 2 (fused): encode head (mean|logv + reparam) + latent2hidden +
#                   decoder GRU + outputs2vocab + log_softmax
# ----------------------------------------------------------------------------
def head_decoder_kernel(h_ref, wml_ref, bml_ref, eps_ref, wl2h_ref, bl2h_ref,
                        emb_ref, wi_ref, wh_ref, bx_ref, bhn_ref,
                        wout_ref, bout_ref,
                        mean_ref, logv_ref, z_ref, logp_ref,
                        gx_ref, hs_ref):
    B = h_ref.shape[0]
    H = wh_ref.shape[0]
    Lp = eps_ref.shape[1]
    T = emb_ref.shape[0] // B

    # ---- hidden2mean / hidden2logv in ONE matmul + reparametrization --------
    ml = (jnp.dot(h_ref[...], wml_ref[...], preferred_element_type=jnp.float32)
          + bml_ref[...])                                 # (B, 2*Lp)
    mean = ml[:, :Lp]
    logv = ml[:, Lp:]
    z = mean + jnp.exp(0.5 * logv) * eps_ref[...]
    mean_ref[...] = mean
    logv_ref[...] = logv
    z_ref[...] = z

    # latent2hidden (padded latent lanes hit zero weight rows -> no effect)
    h0 = (jnp.dot(z, wl2h_ref[...], preferred_element_type=jnp.float32)
          + bl2h_ref[...])                                # (B, H)

    # Hoisted input projections for ALL timesteps (lane-dense 128-wide gates).
    gx_ref[...] = (jnp.dot(emb_ref[...], wi_ref[...],
                           preferred_element_type=jnp.float32)
                   + bx_ref[...])                         # (T*B, GATE)

    wh = wh_ref[...]                                      # (H, GATE)
    bhn = jnp.broadcast_to(bhn_ref[...], (B, H))

    def step(t, h):
        gh = jnp.dot(h, wh, preferred_element_type=jnp.float32)
        i0 = pl.multiple_of(t * B, 8)
        gx = gx_ref[pl.ds(i0, B), :]
        rz = jax.nn.sigmoid(gx[:, :2 * H] + gh[:, :2 * H])        # one sigmoid
        n = jnp.tanh(gx[:, 2 * H:3 * H] + rz[:, :H] * (gh[:, 2 * H:3 * H] + bhn))
        h_new = n + rz[:, H:2 * H] * (h - n)
        hs_ref[pl.ds(i0, B), :] = h_new
        return h_new

    lax.fori_loop(0, T, step, h0, unroll=_unroll_for(T))

    # One big vocab projection + log_softmax; padded vocab lanes carry a -1e30
    # f32 bias so they vanish under exp() and the lse matches the true vocab.
    logits = (jnp.dot(hs_ref[...], wout_ref[...],
                      preferred_element_type=jnp.float32)
              + bout_ref[...])                            # (T*B, Vpad)
    m = jnp.max(logits, axis=-1, keepdims=True)
    lse = m + jnp.log(jnp.sum(jnp.exp(logits - m), axis=-1, keepdims=True))
    logp_ref[...] = logits - lse


# ----------------------------------------------------------------------------
# Parameter construction (deterministic, PyTorch-shaped then fused/padded)
# ----------------------------------------------------------------------------
def _fuse_gru_dir(weight_ih, weight_hh, bias_ih, bias_hh, H, G):
    """PyTorch GRU params (3H,in)/(3H,H)/(3H,)/(3H,) in [r,z,n] order ->
    fused, 128-lane-padded Wi (in,G), Wh (H,G), x-bias (1,G)=bi+[bh_r,bh_z,0],
    and bh_n (1,H)."""
    in_dim = weight_ih.shape[1]
    wi = jnp.zeros((in_dim, G), jnp.float32).at[:, :3 * H].set(weight_ih.T)
    wh = jnp.zeros((H, G), jnp.float32).at[:, :3 * H].set(weight_hh.T)
    bx_raw = bias_ih + jnp.concatenate([bias_hh[:2 * H],
                                        jnp.zeros((H,), bias_hh.dtype)])
    bx = jnp.zeros((1, G), jnp.float32).at[:, :3 * H].set(bx_raw[None, :])
    bhn = bias_hh[2 * H:][None, :]
    return wi, wh, bx, bhn


def init_params(key, vocab_sz, E, H, L, pad_idx, use_unk_idx=False, lane=128):
    ks = jax.random.split(key, 16)
    u = lambda k, shape, bound: jax.random.uniform(k, shape, jnp.float32, -bound, bound)

    emb_rows = vocab_sz + 1 if use_unk_idx else vocab_sz   # UNK row when requested
    emb = jax.random.normal(ks[0], (emb_rows, E), jnp.float32)
    emb = emb.at[pad_idx].set(0.0)   # nn.Embedding padding_idx row is zero

    kr = 1.0 / jnp.sqrt(H)
    wi_f, wh_f, bx_f, bhn_f = _fuse_gru_dir(
        u(ks[1], (3 * H, E), kr), u(ks[2], (3 * H, H), kr),
        u(ks[3], (3 * H,), kr), u(ks[4], (3 * H,), kr), H, GATE)
    wi_b, wh_b, bx_b, bhn_b = _fuse_gru_dir(
        u(ks[5], (3 * H, E), kr), u(ks[6], (3 * H, H), kr),
        u(ks[7], (3 * H,), kr), u(ks[8], (3 * H,), kr), H, GATE)

    # Fused encoder weights: one (E, 2*GATE) input weight, block-diagonal Wh.
    wi_enc = jnp.concatenate([wi_f, wi_b], axis=1)                 # (E, 2G)
    bx_enc = jnp.concatenate([bx_f, bx_b], axis=1)                 # (1, 2G)
    wh_enc = (jnp.zeros((2 * H, 2 * GATE), jnp.float32)
              .at[:H, :GATE].set(wh_f)
              .at[H:, GATE:].set(wh_b))                            # (2H, 2G)
    bhn_enc = jnp.concatenate([bhn_f, bhn_b], axis=1)              # (1, 2H)

    L_pad = _round_up(L, lane)
    V_pad = _round_up(vocab_sz, lane)

    # hidden2mean / hidden2logv : Linear(2H, L), merged into one (2H, 2*L_pad)
    km = 1.0 / jnp.sqrt(2 * H)
    wm = jnp.zeros((2 * H, L_pad), jnp.float32).at[:, :L].set(u(ks[9], (L, 2 * H), km).T)
    bm = jnp.zeros((1, L_pad), jnp.float32).at[:, :L].set(u(ks[10], (L,), km)[None, :])
    wv = jnp.zeros((2 * H, L_pad), jnp.float32).at[:, :L].set(u(ks[11], (L, 2 * H), km).T)
    bv = jnp.zeros((1, L_pad), jnp.float32).at[:, :L].set(u(ks[12], (L,), km)[None, :])
    wml = jnp.concatenate([wm, wv], axis=1)                        # (2H, 2*L_pad)
    bml = jnp.concatenate([bm, bv], axis=1)                        # (1, 2*L_pad)

    # latent2hidden : Linear(L, H); zero rows for padded latent lanes
    kl = 1.0 / jnp.sqrt(L)
    wl2h = jnp.zeros((L_pad, H), jnp.float32).at[:L, :].set(u(ks[13], (H, L), kl).T)
    bl2h = u(ks[14], (H,), kl)[None, :]

    # decoder GRU (unidirectional, 1 layer)
    kd = jax.random.split(ks[15], 6)
    wi_d, wh_d, bx_d, bhn_d = _fuse_gru_dir(
        u(kd[0], (3 * H, E), kr), u(kd[1], (3 * H, H), kr),
        u(kd[2], (3 * H,), kr), u(kd[3], (3 * H,), kr), H, GATE)

    # outputs2vocab : Linear(H, V), lane-padded to V_pad with -1e30 bias (f32)
    kh = 1.0 / jnp.sqrt(H)
    wout = jnp.zeros((H, V_pad), jnp.float32).at[:, :vocab_sz].set(
        u(kd[4], (vocab_sz, H), kh).T)
    bout = jnp.full((1, V_pad), NEG_INF, jnp.float32).at[:, :vocab_sz].set(
        u(kd[5], (vocab_sz,), kh)[None, :])

    return dict(emb=emb,
                wi_enc=wi_enc, wh_enc=wh_enc, bx_enc=bx_enc, bhn_enc=bhn_enc,
                wml=wml, bml=bml, wl2h=wl2h, bl2h=bl2h,
                wi_dec=wi_d, wh_dec=wh_d, bx_dec=bx_d, bhn_dec=bhn_d,
                wout=wout, bout=bout)


# ----------------------------------------------------------------------------
# Forward wrapper
# ----------------------------------------------------------------------------
def molecular_vae_forward(params, input_seqs, rng_key, *,
                          vocab_sz, hidden_dim, latent_dim,
                          sos_idx, eos_idx, pad_idx,
                          dec_token_dropout=0.0, use_unk_idx=False):
    B, T = input_seqs.shape
    H, L, V = hidden_dim, latent_dim, vocab_sz
    E = params["emb"].shape[1]
    L_pad = params["wl2h"].shape[0]
    V_pad = params["wout"].shape[1]
    B_pad = _round_up(B, 8)               # fill f32 sublanes

    k_eps, k_drop = jax.random.split(rng_key)

    seqs = jnp.pad(input_seqs, ((0, B_pad - B), (0, 0)), constant_values=pad_idx)

    # ---- encode -------------------------------------------------------------
    # time-major gather directly: (T, B_pad, E) -> (T*B_pad, E), no transposes
    enc_x = params["emb"][seqs.T].reshape(T * B_pad, E)

    hidden = pl.pallas_call(
        encoder_bigru_kernel,
        out_shape=jax.ShapeDtypeStruct((2, B_pad, H), jnp.float32),
        in_specs=[_vmem()] * 5,
        out_specs=_vmem(),
        scratch_shapes=[pltpu.VMEM((T * B_pad, GATE), jnp.float32),
                        pltpu.VMEM((T * B_pad, GATE), jnp.float32)],
    )(enc_x, params["wi_enc"], params["wh_enc"], params["bx_enc"], params["bhn_enc"])

    # Faithful to torch: hidden.view(-1, 2H) is a raw row-major flatten of the
    # (2, B, H) tensor (for B > 1 it interleaves direction and batch exactly
    # like the reference module).
    hflat = jnp.reshape(hidden[:, :B, :], (-1, 2 * H))              # (B, 2H)
    hflat_pad = jnp.zeros((B_pad, 2 * H), jnp.float32).at[:B].set(hflat)

    eps = jax.random.normal(k_eps, (B_pad, L_pad), jnp.float32)     # samplePrior

    # ---- decoder input (token dropout; statically skipped when p == 0.0) ----
    if dec_token_dropout > 0.0:
        non_terminal = (seqs != sos_idx) & (seqs != eos_idx)
        dp_mask = jax.random.uniform(k_drop, seqs.shape) <= dec_token_dropout  # torch uses <=
        dummy_idx = vocab_sz if use_unk_idx else pad_idx
        dec_seqs = jnp.where(dp_mask & non_terminal, dummy_idx, seqs)
        dec_x = params["emb"][dec_seqs.T].reshape(T * B_pad, E)
    else:
        dec_x = enc_x   # identical input: reuse the encoder gather (no 2nd pass)
    # embedding dropout p=0 -> identity (kept for fidelity)

    # ---- fused head + decode ------------------------------------------------
    mean_p, logv_p, z_p, logp_flat = pl.pallas_call(
        head_decoder_kernel,
        out_shape=(jax.ShapeDtypeStruct((B_pad, L_pad), jnp.float32),
                   jax.ShapeDtypeStruct((B_pad, L_pad), jnp.float32),
                   jax.ShapeDtypeStruct((B_pad, L_pad), jnp.float32),
                   jax.ShapeDtypeStruct((T * B_pad, V_pad), jnp.float32)),
        in_specs=[_vmem()] * 13,
        out_specs=(_vmem(),) * 4,
        scratch_shapes=[pltpu.VMEM((T * B_pad, GATE), jnp.float32),
                        pltpu.VMEM((T * B_pad, H), jnp.float32)],
    )(hflat_pad, params["wml"], params["bml"], eps, params["wl2h"], params["bl2h"],
      dec_x, params["wi_dec"], params["wh_dec"], params["bx_dec"], params["bhn_dec"],
      params["wout"], params["bout"])

    mean, logv, z = mean_p[:B, :L], logv_p[:B, :L], z_p[:B, :L]
    logp = jnp.transpose(logp_flat.reshape(T, B_pad, V_pad)[:, :B, :V], (1, 0, 2))
    return logp, z, mean, logv


# ----------------------------------------------------------------------------
if __name__ == "__main__":
    vocab_sz, embedding_dim, hidden_dim, latent_dim = 12, 16, 32, 16
    sos_idx, eos_idx, pad_idx = 1, 2, 0
    B, T = 2, 8

    root = jax.random.PRNGKey(0)
    k_in, k_param, k_fwd = jax.random.split(root, 3)

    input_seqs = jax.random.randint(k_in, (B, T), 3, vocab_sz, dtype=jnp.int32)
    input_seqs = input_seqs.at[:, 0].set(sos_idx).at[:, -1].set(eos_idx)

    params = init_params(k_param, vocab_sz, embedding_dim, hidden_dim,
                         latent_dim, pad_idx, use_unk_idx=False)

    logp, z, mean, logv = molecular_vae_forward(
        params, input_seqs, k_fwd,
        vocab_sz=vocab_sz, hidden_dim=hidden_dim, latent_dim=latent_dim,
        sos_idx=sos_idx, eos_idx=eos_idx, pad_idx=pad_idx,
        dec_token_dropout=0.0, use_unk_idx=False)

    jax.block_until_ready((logp, z, mean, logv))

    assert logp.shape == (B, T, vocab_sz)
    assert z.shape == (B, latent_dim)
    assert mean.shape == (B, latent_dim)
    assert logv.shape == (B, latent_dim)
    assert bool(jnp.all(jnp.isfinite(logp))) and bool(jnp.all(jnp.isfinite(z)))
    # log_softmax rows must (approximately) exponentiate-sum to 1
    assert jnp.allclose(jnp.sum(jnp.exp(logp), axis=-1), 1.0, atol=1e-4)

    print("KERNEL_OK")
</pallas_src>

<mosaic_0001>
module attributes {stable_mosaic.version = 11 : i64} {
  func.func @encoder_bigru_kernel(%arg0: memref<64x16xf32, #tpu.memory_space<vmem>>, %arg1: memref<16x256xf32, #tpu.memory_space<vmem>>, %arg2: memref<64x256xf32, #tpu.memory_space<vmem>>, %arg3: memref<1x256xf32, #tpu.memory_space<vmem>>, %arg4: memref<1x64xf32, #tpu.memory_space<vmem>>, %arg5: memref<2x8x32xf32, #tpu.memory_space<vmem>>, %arg6: memref<64x128xf32, #tpu.memory_space<vmem>>, %arg7: memref<64x128xf32, #tpu.memory_space<vmem>>) attributes {dimension_semantics = [], scalar_prefetch = 0 : i64, scratch_operands = 2 : i64, tpu.core_type = #tpu.core_type<tc>} {
    %c0 = arith.constant 0 : index
    %c0_0 = arith.constant 0 : index
    %0 = vector.load %arg0[%c0, %c0_0] : memref<64x16xf32, #tpu.memory_space<vmem>>, vector<64x16xf32>
    %c0_1 = arith.constant 0 : index
    %c0_2 = arith.constant 0 : index
    %1 = vector.load %arg1[%c0_1, %c0_2] : memref<16x256xf32, #tpu.memory_space<vmem>>, vector<16x256xf32>
    %cst = arith.constant dense<0.000000e+00> : vector<64x256xf32>
    %2 = tpu.matmul %0, %1, %cst {dimension_numbers = #tpu.dot_dimension_numbers<[1], [0], [0], [1], [0, 0, 1, 1], [], []>} : vector<64x16xf32>, vector<16x256xf32>, vector<64x256xf32> -> vector<64x256xf32>
    %c0_3 = arith.constant 0 : index
    %c0_4 = arith.constant 0 : index
    %3 = vector.load %arg3[%c0_3, %c0_4] : memref<1x256xf32, #tpu.memory_space<vmem>>, vector<1x256xf32>
    %4 = vector.broadcast %3 : vector<1x256xf32> to vector<64x256xf32>
    %5 = arith.addf %2, %4 : vector<64x256xf32>
    %6 = vector.extract_strided_slice %5 {offsets = [0, 0], sizes = [64, 128], strides = [1, 1]} : vector<64x256xf32> to vector<64x128xf32>
    %c0_5 = arith.constant 0 : index
    %c0_6 = arith.constant 0 : index
    %7 = vector.load %arg6[%c0_5, %c0_6] : memref<64x128xf32, #tpu.memory_space<vmem>>, vector<64x128xf32>
    tpu.vector_store %arg6[%c0_5, %c0_6], %6 {strides = array<i32>} : memref<64x128xf32, #tpu.memory_space<vmem>>, vector<64x128xf32>,
    %8 = vector.extract_strided_slice %5 {offsets = [0, 128], sizes = [64, 128], strides = [1, 1]} : vector<64x256xf32> to vector<64x128xf32>
    %c0_7 = arith.constant 0 : index
    %c0_8 = arith.constant 0 : index
    %9 = vector.load %arg7[%c0_7, %c0_8] : memref<64x128xf32, #tpu.memory_space<vmem>>, vector<64x128xf32>
    tpu.vector_store %arg7[%c0_7, %c0_8], %8 {strides = array<i32>} : memref<64x128xf32, #tpu.memory_space<vmem>>, vector<64x128xf32>,
    %c0_9 = arith.constant 0 : index
    %c0_10 = arith.constant 0 : index
    %10 = vector.load %arg2[%c0_9, %c0_10] : memref<64x256xf32, #tpu.memory_space<vmem>>, vector<64x256xf32>
    %c0_11 = arith.constant 0 : index
    %c0_12 = arith.constant 0 : index
    %11 = vector.load %arg4[%c0_11, %c0_12] : memref<1x64xf32, #tpu.memory_space<vmem>>, vector<1x64xf32>
    %12 = vector.shape_cast %11 : vector<1x64xf32> to vector<1x64xf32>
    %13 = vector.broadcast %12 : vector<1x64xf32> to vector<8x64xf32>
    %14 = vector.extract_strided_slice %13 {offsets = [0, 0], sizes = [8, 32], strides = [1, 1]} : vector<8x64xf32> to vector<8x32xf32>
    %15 = vector.extract_strided_slice %13 {offsets = [0, 32], sizes = [8, 32], strides = [1, 1]} : vector<8x64xf32> to vector<8x32xf32>
    %cst_13 = arith.constant 0.000000e+00 : f32
    %16 = vector.broadcast %cst_13 : f32 to vector<8x64xf32>
    %c0_i32 = arith.constant 0 : i32
    %cst_14 = arith.constant dense<0.000000e+00> : vector<8x256xf32>
    %17 = tpu.matmul %16, %10, %cst_14 {dimension_numbers = #tpu.dot_dimension_numbers<[1], [0], [0], [1], [0, 0, 1, 1], [], []>} : vector<8x64xf32>, vector<64x256xf32>, vector<8x256xf32> -> vector<8x256xf32>
    %c8_i32 = arith.constant 8 : i32
    %18 = arith.muli %c0_i32, %c8_i32 : i32
    %19 = tpu.assume_multiple %18, 8 : i32
    %c7_i32 = arith.constant 7 : i32
    %20 = arith.subi %c7_i32, %c0_i32 : i32
    %c8_i32_15 = arith.constant 8 : i32
    %21 = arith.muli %20, %c8_i32_15 : i32
    %22 = tpu.assume_multiple %21, 8 : i32
    %23 = arith.index_cast %19 : i32 to index
    %c0_16 = arith.constant 0 : index
    %24 = vector.load %arg6[%23, %c0_16] : memref<64x128xf32, #tpu.memory_space<vmem>>, vector<8x128xf32>
    %25 = arith.index_cast %22 : i32 to index
    %c0_17 = arith.constant 0 : index
    %26 = vector.load %arg7[%25, %c0_17] : memref<64x128xf32, #tpu.memory_space<vmem>>, vector<8x128xf32>
    %27 = vector.extract_strided_slice %24 {offsets = [0, 0], sizes = [8, 64], strides = [1, 1]} : vector<8x128xf32> to vector<8x64xf32>
    %28 = vector.extract_strided_slice %17 {offsets = [0, 0], sizes = [8, 64], strides = [1, 1]} : vector<8x256xf32> to vector<8x64xf32>
    %29 = arith.addf %27, %28 : vector<8x64xf32>
    %30 = arith.negf %29 : vector<8x64xf32>
    %31 = math.exp %30 : vector<8x64xf32>
    %cst_18 = arith.constant 1.000000e+00 : f32
    %32 = vector.broadcast %cst_18 : f32 to vector<8x64xf32>
    %33 = arith.addf %32, %31 : vector<8x64xf32>
    %34 = arith.divf %32, %33 : vector<8x64xf32>
    %35 = vector.extract_strided_slice %24 {offsets = [0, 64], sizes = [8, 32], strides = [1, 1]} : vector<8x128xf32> to vector<8x32xf32>
    %36 = vector.extract_strided_slice %34 {offsets = [0, 0], sizes = [8, 32], strides = [1, 1]} : vector<8x64xf32> to vector<8x32xf32>
    %37 = vector.extract_strided_slice %17 {offsets = [0, 64], sizes = [8, 32], strides = [1, 1]} : vector<8x256xf32> to vector<8x32xf32>
    %38 = arith.addf %37, %14 : vector<8x32xf32>
    %39 = arith.mulf %36, %38 : vector<8x32xf32>
    %40 = arith.addf %35, %39 : vector<8x32xf32>
    %41 = math.tanh %40 : vector<8x32xf32>
    %42 = vector.extract_strided_slice %34 {offsets = [0, 32], sizes = [8, 32], strides = [1, 1]} : vector<8x64xf32> to vector<8x32xf32>
    %43 = vector.extract_strided_slice %16 {offsets = [0, 0], sizes = [8, 32], strides = [1, 1]} : vector<8x64xf32> to vector<8x32xf32>
    %44 = arith.subf %43, %41 : vector<8x32xf32>
    %45 = arith.mulf %42, %44 : vector<8x32xf32>
    %46 = arith.addf %41, %45 : vector<8x32xf32>
    %47 = vector.extract_strided_slice %26 {offsets = [0, 0], sizes = [8, 64], strides = [1, 1]} : vector<8x128xf32> to vector<8x64xf32>
    %48 = vector.extract_strided_slice %17 {offsets = [0, 128], sizes = [8, 64], strides = [1, 1]} : vector<8x256xf32> to vector<8x64xf32>
    %49 = arith.addf %47, %48 : vector<8x64xf32>
    %50 = arith.negf %49 : vector<8x64xf32>
    %51 = math.exp %50 : vector<8x64xf32>
    %cst_19 = arith.constant 1.000000e+00 : f32
    %52 = vector.broadcast %cst_19 : f32 to vector<8x64xf32>
    %53 = arith.addf %52, %51 : vector<8x64xf32>
    %54 = arith.divf %52, %53 : vector<8x64xf32>
    %55 = vector.extract_strided_slice %26 {offsets = [0, 64], sizes = [8, 32], strides = [1, 1]} : vector<8x128xf32> to vector<8x32xf32>
    %56 = vector.extract_strided_slice %54 {offsets = [0, 0], sizes = [8, 32], strides = [1, 1]} : vector<8x64xf32> to vector<8x32xf32>
    %57 = vector.extract_strided_slice %17 {offsets = [0, 192], sizes = [8, 32], strides = [1, 1]} : vector<8x256xf32> to vector<8x32xf32>
    %58 = arith.addf %57, %15 : vector<8x32xf32>
    %59 = arith.mulf %56, %58 : vector<8x32xf32>
    %60 = arith.addf %55, %59 : vector<8x32xf32>
    %61 = math.tanh %60 : vector<8x32xf32>
    %62 = vector.extract_strided_slice %54 {offsets = [0, 32], sizes = [8, 32], strides = [1, 1]} : vector<8x64xf32> to vector<8x32xf32>
    %63 = vector.extract_strided_slice %16 {offsets = [0, 32], sizes = [8, 32], strides = [1, 1]} : vector<8x64xf32> to vector<8x32xf32>
    %64 = arith.subf %63, %61 : vector<8x32xf32>
    %65 = arith.mulf %62, %64 : vector<8x32xf32>
    %66 = arith.addf %61, %65 : vector<8x32xf32>
    %67 = tpu.concatenate %46, %66 in 1 : vector<8x32xf32>, vector<8x32xf32> -> vector<8x64xf32>
    %c1_i32 = arith.constant 1 : i32
    %cst_20 = arith.constant dense<0.000000e+00> : vector<8x256xf32>
    %68 = tpu.matmul %67, %10, %cst_20 {dimension_numbers = #tpu.dot_dimension_numbers<[1], [0], [0], [1], [0, 0, 1, 1], [], []>} : vector<8x64xf32>, vector<64x256xf32>, vector<8x256xf32> -> vector<8x256xf32>
    %c8_i32_21 = arith.constant 8 : i32
    %69 = arith.muli %c1_i32, %c8_i32_21 : i32
    %70 = tpu.assume_multiple %69, 8 : i32
    %c7_i32_22 = arith.constant 7 : i32
    %71 = arith.subi %c7_i32_22, %c1_i32 : i32
    %c8_i32_23 = arith.constant 8 : i32
    %72 = arith.muli %71, %c8_i32_23 : i32
    %73 = tpu.assume_multiple %72, 8 : i32
    %74 = arith.index_cast %70 : i32 to index
    %c0_24 = arith.constant 0 : index
    %75 = vector.load %arg6[%74, %c0_24] : memref<64x128xf32, #tpu.memory_space<vmem>>, vector<8x128xf32>
    %76 = arith.index_cast %73 : i32 to index
    %c0_25 = arith.constant 0 : index
    %77 = vector.load %arg7[%76, %c0_25] : memref<64x128xf32, #tpu.memory_space<vmem>>, vector<8x128xf32>
    %78 = vector.extract_strided_slice %75 {offsets = [0, 0], sizes = [8, 64], strides = [1, 1]} : vector<8x128xf32> to vector<8x64xf32>
    %79 = vector.extract_strided_slice %68 {offsets = [0, 0], sizes = [8, 64], strides = [1, 1]} : vector<8x256xf32> to vector<8x64xf32>
    %80 = arith.addf %78, %79 : vector<8x64xf32>
    %81 = arith.negf %80 : vector<8x64xf32>
    %82 = math.exp %81 : vector<8x64xf32>
    %cst_26 = arith.constant 1.000000e+00 : f32
    %83 = vector.broadcast %cst_26 : f32 to vector<8x64xf32>
    %84 = arith.addf %83, %82 : vector<8x64xf32>
    %85 = arith.divf %83, %84 : vector<8x64xf32>
    %86 = vector.extract_strided_slice %75 {offsets = [0, 64], sizes = [8, 32], strides = [1, 1]} : vector<8x128xf32> to vector<8x32xf32>
    %87 = vector.extract_strided_slice %85 {offsets = [0, 0], sizes = [8, 32], strides = [1, 1]} : vector<8x64xf32> to vector<8x32xf32>
    %88 = vector.extract_strided_slice %68 {offsets = [0, 64], sizes = [8, 32], strides = [1, 1]} : vector<8x256xf32> to vector<8x32xf32>
    %89 = arith.addf %88, %14 : vector<8x32xf32>
    %90 = arith.mulf %87, %89 : vector<8x32xf32>
    %91 = arith.addf %86, %90 : vector<8x32xf32>
    %92 = math.tanh %91 : vector<8x32xf32>
    %93 = vector.extract_strided_slice %85 {offsets = [0, 32], sizes = [8, 32], strides = [1, 1]} : vector<8x64xf32> to vector<8x32xf32>
    %94 = vector.extract_strided_slice %67 {offsets = [0, 0], sizes = [8, 32], strides = [1, 1]} : vector<8x64xf32> to vector<8x32xf32>
    %95 = arith.subf %94, %92 : vector<8x32xf32>
    %96 = arith.mulf %93, %95 : vector<8x32xf32>
    %97 = arith.addf %92, %96 : vector<8x32xf32>
    %98 = vector.extract_strided_slice %77 {offsets = [0, 0], sizes = [8, 64], strides = [1, 1]} : vector<8x128xf32> to vector<8x64xf32>
    %99 = vector.extract_strided_slice %68 {offsets = [0, 128], sizes = [8, 64], strides = [1, 1]} : vector<8x256xf32> to vector<8x64xf32>
    %100 = arith.addf %98, %99 : vector<8x64xf32>
    %101 = arith.negf %100 : vector<8x64xf32>
    %102 = math.exp %101 : vector<8x64xf32>
    %cst_27 = arith.constant 1.000000e+00 : f32
    %103 = vector.broadcast %cst_27 : f32 to vector<8x64xf32>
    %104 = arith.addf %103, %102 : vector<8x64xf32>
    %105 = arith.divf %103, %104 : vector<8x64xf32>
    %106 = vector.extract_strided_slice %77 {offsets = [0, 64], sizes = [8, 32], strides = [1, 1]} : vector<8x128xf32> to vector<8x32xf32>
    %107 = vector.extract_strided_slice %105 {offsets = [0, 0], sizes = [8, 32], strides = [1, 1]} : vector<8x64xf32> to vector<8x32xf32>
    %108 = vector.extract_strided_slice %68 {offsets = [0, 192], sizes = [8, 32], strides = [1, 1]} : vector<8x256xf32> to vector<8x32xf32>
    %109 = arith.addf %108, %15 : vector<8x32xf32>
    %110 = arith.mulf %107, %109 : vector<8x32xf32>
    %111 = arith.addf %106, %110 : vector<8x32xf32>
    %112 = math.tanh %111 : vector<8x32xf32>
    %113 = vector.extract_strided_slice %105 {offsets = [0, 32], sizes = [8, 32], strides = [1, 1]} : vector<8x64xf32> to vector<8x32xf32>
    %114 = vector.extract_strided_slice %67 {offsets = [0, 32], sizes = [8, 32], strides = [1, 1]} : vector<8x64xf32> to vector<8x32xf32>
    %115 = arith.subf %114, %112 : vector<8x32xf32>
    %116 = arith.mulf %113, %115 : vector<8x32xf32>
    %117 = arith.addf %112, %116 : vector<8x32xf32>
    %118 = tpu.concatenate %97, %117 in 1 : vector<8x32xf32>, vector<8x32xf32> -> vector<8x64xf32>
    %c2_i32 = arith.constant 2 : i32
    %cst_28 = arith.constant dense<0.000000e+00> : vector<8x256xf32>
    %119 = tpu.matmul %118, %10, %cst_28 {dimension_numbers = #tpu.dot_dimension_numbers<[1], [0], [0], [1], [0, 0, 1, 1], [], []>} : vector<8x64xf32>, vector<64x256xf32>, vector<8x256xf32> -> vector<8x256xf32>
    %c8_i32_29 = arith.constant 8 : i32
    %120 = arith.muli %c2_i32, %c8_i32_29 : i32
    %121 = tpu.assume_multiple %120, 8 : i32
    %c7_i32_30 = arith.constant 7 : i32
    %122 = arith.subi %c7_i32_30, %c2_i32 : i32
    %c8_i32_31 = arith.constant 8 : i32
    %123 = arith.muli %122, %c8_i32_31 : i32
    %124 = tpu.assume_multiple %123, 8 : i32
    %125 = arith.index_cast %121 : i32 to index
    %c0_32 = arith.constant 0 : index
    %126 = vector.load %arg6[%125, %c0_32] : memref<64x128xf32, #tpu.memory_space<vmem>>, vector<8x128xf32>
    %127 = arith.index_cast %124 : i32 to index
    %c0_33 = arith.constant 0 : index
    %128 = vector.load %arg7[%127, %c0_33] : memref<64x128xf32, #tpu.memory_space<vmem>>, vector<8x128xf32>
    %129 = vector.extract_strided_slice %126 {offsets = [0, 0], sizes = [8, 64], strides = [1, 1]} : vector<8x128xf32> to vector<8x64xf32>
    %130 = vector.extract_strided_slice %119 {offsets = [0, 0], sizes = [8, 64], strides = [1, 1]} : vector<8x256xf32> to vector<8x64xf32>
    %131 = arith.addf %129, %130 : vector<8x64xf32>
    %132 = arith.negf %131 : vector<8x64xf32>
    %133 = math.exp %132 : vector<8x64xf32>
    %cst_34 = arith.constant 1.000000e+00 : f32
    %134 = vector.broadcast %cst_34 : f32 to vector<8x64xf32>
    %135 = arith.addf %134, %133 : vector<8x64xf32>
    %136 = arith.divf %134, %135 : vector<8x64xf32>
    %137 = vector.extract_strided_slice %126 {offsets = [0, 64], sizes = [8, 32], strides = [1, 1]} : vector<8x128xf32> to vector<8x32xf32>
    %138 = vector.extract_strided_slice %136 {offsets = [0, 0], sizes = [8, 32], strides = [1, 1]} : vector<8x64xf32> to vector<8x32xf32>
    %139 = vector.extract_strided_slice %119 {offsets = [0, 64], sizes = [8, 32], strides = [1, 1]} : vector<8x256xf32> to vector<8x32xf32>
    %140 = arith.addf %139, %14 : vector<8x32xf32>
    %141 = arith.mulf %138, %140 : vector<8x32xf32>
    %142 = arith.addf %137, %141 : vector<8x32xf32>
    %143 = math.tanh %142 : vector<8x32xf32>
    %144 = vector.extract_strided_slice %136 {offsets = [0, 32], sizes = [8, 32], strides = [1, 1]} : vector<8x64xf32> to vector<8x32xf32>
    %145 = vector.extract_strided_slice %118 {offsets = [0, 0], sizes = [8, 32], strides = [1, 1]} : vector<8x64xf32> to vector<8x32xf32>
    %146 = arith.subf %145, %143 : vector<8x32xf32>
    %147 = arith.mulf %144, %146 : vector<8x32xf32>
    %148 = arith.addf %143, %147 : vector<8x32xf32>
    %149 = vector.extract_strided_slice %128 {offsets = [0, 0], sizes = [8, 64], strides = [1, 1]} : vector<8x128xf32> to vector<8x64xf32>
    %150 = vector.extract_strided_slice %119 {offsets = [0, 128], sizes = [8, 64], strides = [1, 1]} : vector<8x256xf32> to vector<8x64xf32>
    %151 = arith.addf %149, %150 : vector<8x64xf32>
    %152 = arith.negf %151 : vector<8x64xf32>
    %153 = math.exp %152 : vector<8x64xf32>
    %cst_35 = arith.constant 1.000000e+00 : f32
    %154 = vector.broadcast %cst_35 : f32 to vector<8x64xf32>
    %155 = arith.addf %154, %153 : vector<8x64xf32>
    %156 = arith.divf %154, %155 : vector<8x64xf32>
    %157 = vector.extract_strided_slice %128 {offsets = [0, 64], sizes = [8, 32], strides = [1, 1]} : vector<8x128xf32> to vector<8x32xf32>
    %158 = vector.extract_strided_slice %156 {offsets = [0, 0], sizes = [8, 32], strides = [1, 1]} : vector<8x64xf32> to vector<8x32xf32>
    %159 = vector.extract_strided_slice %119 {offsets = [0, 192], sizes = [8, 32], strides = [1, 1]} : vector<8x256xf32> to vector<8x32xf32>
    %160 = arith.addf %159, %15 : vector<8x32xf32>
    %161 = arith.mulf %158, %160 : vector<8x32xf32>
    %162 = arith.addf %157, %161 : vector<8x32xf32>
    %163 = math.tanh %162 : vector<8x32xf32>
    %164 = vector.extract_strided_slice %156 {offsets = [0, 32], sizes = [8, 32], strides = [1, 1]} : vector<8x64xf32> to vector<8x32xf32>
    %165 = vector.extract_strided_slice %118 {offsets = [0, 32], sizes = [8, 32], strides = [1, 1]} : vector<8x64xf32> to vector<8x32xf32>
    %166 = arith.subf %165, %163 : vector<8x32xf32>
    %167 = arith.mulf %164, %166 : vector<8x32xf32>
    %168 = arith.addf %163, %167 : vector<8x32xf32>
    %169 = tpu.concatenate %148, %168 in 1 : vector<8x32xf32>, vector<8x32xf32> -> vector<8x64xf32>
    %c3_i32 = arith.constant 3 : i32
    %cst_36 = arith.constant dense<0.000000e+00> : vector<8x256xf32>
    %170 = tpu.matmul %169, %10, %cst_36 {dimension_numbers = #tpu.dot_dimension_numbers<[1], [0], [0], [1], [0, 0, 1, 1], [], []>} : vector<8x64xf32>, vector<64x256xf32>, vector<8x256xf32> -> vector<8x256xf32>
    %c8_i32_37 = arith.constant 8 : i32
    %171 = arith.muli %c3_i32, %c8_i32_37 : i32
    %172 = tpu.assume_multiple %171, 8 : i32
    %c7_i32_38 = arith.constant 7 : i32
    %173 = arith.subi %c7_i32_38, %c3_i32 : i32
    %c8_i32_39 = arith.constant 8 : i32
    %174 = arith.muli %173, %c8_i32_39 : i32
    %175 = tpu.assume_multiple %174, 8 : i32
    %176 = arith.index_cast %172 : i32 to index
    %c0_40 = arith.constant 0 : index
    %177 = vector.load %arg6[%176, %c0_40] : memref<64x128xf32, #tpu.memory_space<vmem>>, vector<8x128xf32>
    %178 = arith.index_cast %175 : i32 to index
    %c0_41 = arith.constant 0 : index
    %179 = vector.load %arg7[%178, %c0_41] : memref<64x128xf32, #tpu.memory_space<vmem>>, vector<8x128xf32>
    %180 = vector.extract_strided_slice %177 {offsets = [0, 0], sizes = [8, 64], strides = [1, 1]} : vector<8x128xf32> to vector<8x64xf32>
    %181 = vector.extract_strided_slice %170 {offsets = [0, 0], sizes = [8, 64], strides = [1, 1]} : vector<8x256xf32> to vector<8x64xf32>
    %182 = arith.addf %180, %181 : vector<8x64xf32>
    %183 = arith.negf %182 : vector<8x64xf32>
    %184 = math.exp %183 : vector<8x64xf32>
    %cst_42 = arith.constant 1.000000e+00 : f32
    %185 = vector.broadcast %cst_42 : f32 to vector<8x64xf32>
    %186 = arith.addf %185, %184 : vector<8x64xf32>
    %187 = arith.divf %185, %186 : vector<8x64xf32>
    %188 = vector.extract_strided_slice %177 {offsets = [0, 64], sizes = [8, 32], strides = [1, 1]} : vector<8x128xf32> to vector<8x32xf32>
    %189 = vector.extract_strided_slice %187 {offsets = [0, 0], sizes = [8, 32], strides = [1, 1]} : vector<8x64xf32> to vector<8x32xf32>
    %190 = vector.extract_strided_slice %170 {offsets = [0, 64], sizes = [8, 32], strides = [1, 1]} : vector<8x256xf32> to vector<8x32xf32>
    %191 = arith.addf %190, %14 : vector<8x32xf32>
    %192 = arith.mulf %189, %191 : vector<8x32xf32>
    %193 = arith.addf %188, %192 : vector<8x32xf32>
    %194 = math.tanh %193 : vector<8x32xf32>
    %195 = vector.extract_strided_slice %187 {offsets = [0, 32], sizes = [8, 32], strides = [1, 1]} : vector<8x64xf32> to vector<8x32xf32>
    %196 = vector.extract_strided_slice %169 {offsets = [0, 0], sizes = [8, 32], strides = [1, 1]} : vector<8x64xf32> to vector<8x32xf32>
    %197 = arith.subf %196, %194 : vector<8x32xf32>
    %198 = arith.mulf %195, %197 : vector<8x32xf32>
    %199 = arith.addf %194, %198 : vector<8x32xf32>
    %200 = vector.extract_strided_slice %179 {offsets = [0, 0], sizes = [8, 64], strides = [1, 1]} : vector<8x128xf32> to vector<8x64xf32>
    %201 = vector.extract_strided_slice %170 {offsets = [0, 128], sizes = [8, 64], strides = [1, 1]} : vector<8x256xf32> to vector<8x64xf32>
    %202 = arith.addf %200, %201 : vector<8x64xf32>
    %203 = arith.negf %202 : vector<8x64xf32>
    %204 = math.exp %203 : vector<8x64xf32>
    %cst_43 = arith.constant 1.000000e+00 : f32
    %205 = vector.broadcast %cst_43 : f32 to vector<8x64xf32>
    %206 = arith.addf %205, %204 : vector<8x64xf32>
    %207 = arith.divf %205, %206 : vector<8x64xf32>
    %208 = vector.extract_strided_slice %179 {offsets = [0, 64], sizes = [8, 32], strides = [1, 1]} : vector<8x128xf32> to vector<8x32xf32>
    %209 = vector.extract_strided_slice %207 {offsets = [0, 0], sizes = [8, 32], strides = [1, 1]} : vector<8x64xf32> to vector<8x32xf32>
    %210 = vector.extract_strided_slice %170 {offsets = [0, 192], sizes = [8, 32], strides = [1, 1]} : vector<8x256xf32> to vector<8x32xf32>
    %211 = arith.addf %210, %15 : vector<8x32xf32>
    %212 = arith.mulf %209, %211 : vector<8x32xf32>
    %213 = arith.addf %208, %212 : vector<8x32xf32>
    %214 = math.tanh %213 : vector<8x32xf32>
    %215 = vector.extract_strided_slice %207 {offsets = [0, 32], sizes = [8, 32], strides = [1, 1]} : vector<8x64xf32> to vector<8x32xf32>
    %216 = vector.extract_strided_slice %169 {offsets = [0, 32], sizes = [8, 32], strides = [1, 1]} : vector<8x64xf32> to vector<8x32xf32>
    %217 = arith.subf %216, %214 : vector<8x32xf32>
    %218 = arith.mulf %215, %217 : vector<8x32xf32>
    %219 = arith.addf %214, %218 : vector<8x32xf32>
    %220 = tpu.concatenate %199, %219 in 1 : vector<8x32xf32>, vector<8x32xf32> -> vector<8x64xf32>
    %c4_i32 = arith.constant 4 : i32
    %cst_44 = arith.constant dense<0.000000e+00> : vector<8x256xf32>
    %221 = tpu.matmul %220, %10, %cst_44 {dimension_numbers = #tpu.dot_dimension_numbers<[1], [0], [0], [1], [0, 0, 1, 1], [], []>} : vector<8x64xf32>, vector<64x256xf32>, vector<8x256xf32> -> vector<8x256xf32>
    %c8_i32_45 = arith.constant 8 : i32
    %222 = arith.muli %c4_i32, %c8_i32_45 : i32
    %223 = tpu.assume_multiple %222, 8 : i32
    %c7_i32_46 = arith.constant 7 : i32
    %224 = arith.subi %c7_i32_46, %c4_i32 : i32
    %c8_i32_47 = arith.constant 8 : i32
    %225 = arith.muli %224, %c8_i32_47 : i32
    %226 = tpu.assume_multiple %225, 8 : i32
    %227 = arith.index_cast %223 : i32 to index
    %c0_48 = arith.constant 0 : index
    %228 = vector.load %arg6[%227, %c0_48] : memref<64x128xf32, #tpu.memory_space<vmem>>, vector<8x128xf32>
    %229 = arith.index_cast %226 : i32 to index
    %c0_49 = arith.constant 0 : index
    %230 = vector.load %arg7[%229, %c0_49] : memref<64x128xf32, #tpu.memory_space<vmem>>, vector<8x128xf32>
    %231 = vector.extract_strided_slice %228 {offsets = [0, 0], sizes = [8, 64], strides = [1, 1]} : vector<8x128xf32> to vector<8x64xf32>
    %232 = vector.extract_strided_slice %221 {offsets = [0, 0], sizes = [8, 64], strides = [1, 1]} : vector<8x256xf32> to vector<8x64xf32>
    %233 = arith.addf %231, %232 : vector<8x64xf32>
    %234 = arith.negf %233 : vector<8x64xf32>
    %235 = math.exp %234 : vector<8x64xf32>
    %cst_50 = arith.constant 1.000000e+00 : f32
    %236 = vector.broadcast %cst_50 : f32 to vector<8x64xf32>
    %237 = arith.addf %236, %235 : vector<8x64xf32>
    %238 = arith.divf %236, %237 : vector<8x64xf32>
    %239 = vector.extract_strided_slice %228 {offsets = [0, 64], sizes = [8, 32], strides = [1, 1]} : vector<8x128xf32> to vector<8x32xf32>
    %240 = vector.extract_strided_slice %238 {offsets = [0, 0], sizes = [8, 32], strides = [1, 1]} : vector<8x64xf32> to vector<8x32xf32>
    %241 = vector.extract_strided_slice %221 {offsets = [0, 64], sizes = [8, 32], strides = [1, 1]} : vector<8x256xf32> to vector<8x32xf32>
    %242 = arith.addf %241, %14 : vector<8x32xf32>
    %243 = arith.mulf %240, %242 : vector<8x32xf32>
    %244 = arith.addf %239, %243 : vector<8x32xf32>
    %245 = math.tanh %244 : vector<8x32xf32>
    %246 = vector.extract_strided_slice %238 {offsets = [0, 32], sizes = [8, 32], strides = [1, 1]} : vector<8x64xf32> to vector<8x32xf32>
    %247 = vector.extract_strided_slice %220 {offsets = [0, 0], sizes = [8, 32], strides = [1, 1]} : vector<8x64xf32> to vector<8x32xf32>
    %248 = arith.subf %247, %245 : vector<8x32xf32>
    %249 = arith.mulf %246, %248 : vector<8x32xf32>
    %250 = arith.addf %245, %249 : vector<8x32xf32>
    %251 = vector.extract_strided_slice %230 {offsets = [0, 0], sizes = [8, 64], strides = [1, 1]} : vector<8x128xf32> to vector<8x64xf32>
    %252 = vector.extract_strided_slice %221 {offsets = [0, 128], sizes = [8, 64], strides = [1, 1]} : vector<8x256xf32> to vector<8x64xf32>
    %253 = arith.addf %251, %252 : vector<8x64xf32>
    %254 = arith.negf %253 : vector<8x64xf32>
    %255 = math.exp %254 : vector<8x64xf32>
    %cst_51 = arith.constant 1.000000e+00 : f32
    %256 = vector.broadcast %cst_51 : f32 to vector<8x64xf32>
    %257 = arith.addf %256, %255 : vector<8x64xf32>
    %258 = arith.divf %256, %257 : vector<8x64xf32>
    %259 = vector.extract_strided_slice %230 {offsets = [0, 64], sizes = [8, 32], strides = [1, 1]} : vector<8x128xf32> to vector<8x32xf32>
    %260 = vector.extract_strided_slice %258 {offsets = [0, 0], sizes = [8, 32], strides = [1, 1]} : vector<8x64xf32> to vector<8x32xf32>
    %261 = vector.extract_strided_slice %221 {offsets = [0, 192], sizes = [8, 32], strides = [1, 1]} : vector<8x256xf32> to vector<8x32xf32>
    %262 = arith.addf %261, %15 : vector<8x32xf32>
    %263 = arith.mulf %260, %262 : vector<8x32xf32>
    %264 = arith.addf %259, %263 : vector<8x32xf32>
    %265 = math.tanh %264 : vector<8x32xf32>
    %266 = vector.extract_strided_slice %258 {offsets = [0, 32], sizes = [8, 32], strides = [1, 1]} : vector<8x64xf32> to vector<8x32xf32>
    %267 = vector.extract_strided_slice %220 {offsets = [0, 32], sizes = [8, 32], strides = [1, 1]} : vector<8x64xf32> to vector<8x32xf32>
    %268 = arith.subf %267, %265 : vector<8x32xf32>
    %269 = arith.mulf %266, %268 : vector<8x32xf32>
    %270 = arith.addf %265, %269 : vector<8x32xf32>
    %271 = tpu.concatenate %250, %270 in 1 : vector<8x32xf32>, vector<8x32xf32> -> vector<8x64xf32>
    %c5_i32 = arith.constant 5 : i32
    %cst_52 = arith.constant dense<0.000000e+00> : vector<8x256xf32>
    %272 = tpu.matmul %271, %10, %cst_52 {dimension_numbers = #tpu.dot_dimension_numbers<[1], [0], [0], [1], [0, 0, 1, 1], [], []>} : vector<8x64xf32>, vector<64x256xf32>, vector<8x256xf32> -> vector<8x256xf32>
    %c8_i32_53 = arith.constant 8 : i32
    %273 = arith.muli %c5_i32, %c8_i32_53 : i32
    %274 = tpu.assume_multiple %273, 8 : i32
    %c7_i32_54 = arith.constant 7 : i32
    %275 = arith.subi %c7_i32_54, %c5_i32 : i32
    %c8_i32_55 = arith.constant 8 : i32
    %276 = arith.muli %275, %c8_i32_55 : i32
    %277 = tpu.assume_multiple %276, 8 : i32
    %278 = arith.index_cast %274 : i32 to index
    %c0_56 = arith.constant 0 : index
    %279 = vector.load %arg6[%278, %c0_56] : memref<64x128xf32, #tpu.memory_space<vmem>>, vector<8x128xf32>
    %280 = arith.index_cast %277 : i32 to index
    %c0_57 = arith.constant 0 : index
    %281 = vector.load %arg7[%280, %c0_57] : memref<64x128xf32, #tpu.memory_space<vmem>>, vector<8x128xf32>
    %282 = vector.extract_strided_slice %279 {offsets = [0, 0], sizes = [8, 64], strides = [1, 1]} : vector<8x128xf32> to vector<8x64xf32>
    %283 = vector.extract_strided_slice %272 {offsets = [0, 0], sizes = [8, 64], strides = [1, 1]} : vector<8x256xf32> to vector<8x64xf32>
    %284 = arith.addf %282, %283 : vector<8x64xf32>
    %285 = arith.negf %284 : vector<8x64xf32>
    %286 = math.exp %285 : vector<8x64xf32>
    %cst_58 = arith.constant 1.000000e+00 : f32
    %287 = vector.broadcast %cst_58 : f32 to vector<8x64xf32>
    %288 = arith.addf %287, %286 : vector<8x64xf32>
    %289 = arith.divf %287, %288 : vector<8x64xf32>
    %290 = vector.extract_strided_slice %279 {offsets = [0, 64], sizes = [8, 32], strides = [1, 1]} : vector<8x128xf32> to vector<8x32xf32>
    %291 = vector.extract_strided_slice %289 {offsets = [0, 0], sizes = [8, 32], strides = [1, 1]} : vector<8x64xf32> to vector<8x32xf32>
    %292 = vector.extract_strided_slice %272 {offsets = [0, 64], sizes = [8, 32], strides = [1, 1]} : vector<8x256xf32> to vector<8x32xf32>
    %293 = arith.addf %292, %14 : vector<8x32xf32>
    %294 = arith.mulf %291, %293 : vector<8x32xf32>
    %295 = arith.addf %290, %294 : vector<8x32xf32>
    %296 = math.tanh %295 : vector<8x32xf32>
    %297 = vector.extract_strided_slice %289 {offsets = [0, 32], sizes = [8, 32], strides = [1, 1]} : vector<8x64xf32> to vector<8x32xf32>
    %298 = vector.extract_strided_slice %271 {offsets = [0, 0], sizes = [8, 32], strides = [1, 1]} : vector<8x64xf32> to vector<8x32xf32>
    %299 = arith.subf %298, %296 : vector<8x32xf32>
    %300 = arith.mulf %297, %299 : vector<8x32xf32>
    %301 = arith.addf %296, %300 : vector<8x32xf32>
    %302 = vector.extract_strided_slice %281 {offsets = [0, 0], sizes = [8, 64], strides = [1, 1]} : vector<8x128xf32> to vector<8x64xf32>
    %303 = vector.extract_strided_slice %272 {offsets = [0, 128], sizes = [8, 64], strides = [1, 1]} : vector<8x256xf32> to vector<8x64xf32>
    %304 = arith.addf %302, %303 : vector<8x64xf32>
    %305 = arith.negf %304 : vector<8x64xf32>
    %306 = math.exp %305 : vector<8x64xf32>
    %cst_59 = arith.constant 1.000000e+00 : f32
    %307 = vector.broadcast %cst_59 : f32 to vector<8x64xf32>
    %308 = arith.addf %307, %306 : vector<8x64xf32>
    %309 = arith.divf %307, %308 : vector<8x64xf32>
    %310 = vector.extract_strided_slice %281 {offsets = [0, 64], sizes = [8, 32], strides = [1, 1]} : vector<8x128xf32> to vector<8x32xf32>
    %311 = vector.extract_strided_slice %309 {offsets = [0, 0], sizes = [8, 32], strides = [1, 1]} : vector<8x64xf32> to vector<8x32xf32>
    %312 = vector.extract_strided_slice %272 {offsets = [0, 192], sizes = [8, 32], strides = [1, 1]} : vector<8x256xf32> to vector<8x32xf32>
    %313 = arith.addf %312, %15 : vector<8x32xf32>
    %314 = arith.mulf %311, %313 : vector<8x32xf32>
    %315 = arith.addf %310, %314 : vector<8x32xf32>
    %316 = math.tanh %315 : vector<8x32xf32>
    %317 = vector.extract_strided_slice %309 {offsets = [0, 32], sizes = [8, 32], strides = [1, 1]} : vector<8x64xf32> to vector<8x32xf32>
    %318 = vector.extract_strided_slice %271 {offsets = [0, 32], sizes = [8, 32], strides = [1, 1]} : vector<8x64xf32> to vector<8x32xf32>
    %319 = arith.subf %318, %316 : vector<8x32xf32>
    %320 = arith.mulf %317, %319 : vector<8x32xf32>
    %321 = arith.addf %316, %320 : vector<8x32xf32>
    %322 = tpu.concatenate %301, %321 in 1 : vector<8x32xf32>, vector<8x32xf32> -> vector<8x64xf32>
    %c6_i32 = arith.constant 6 : i32
    %cst_60 = arith.constant dense<0.000000e+00> : vector<8x256xf32>
    %323 = tpu.matmul %322, %10, %cst_60 {dimension_numbers = #tpu.dot_dimension_numbers<[1], [0], [0], [1], [0, 0, 1, 1], [], []>} : vector<8x64xf32>, vector<64x256xf32>, vector<8x256xf32> -> vector<8x256xf32>
    %c8_i32_61 = arith.constant 8 : i32
    %324 = arith.muli %c6_i32, %c8_i32_61 : i32
    %325 = tpu.assume_multiple %324, 8 : i32
    %c7_i32_62 = arith.constant 7 : i32
    %326 = arith.subi %c7_i32_62, %c6_i32 : i32
    %c8_i32_63 = arith.constant 8 : i32
    %327 = arith.muli %326, %c8_i32_63 : i32
    %328 = tpu.assume_multiple %327, 8 : i32
    %329 = arith.index_cast %325 : i32 to index
    %c0_64 = arith.constant 0 : index
    %330 = vector.load %arg6[%329, %c0_64] : memref<64x128xf32, #tpu.memory_space<vmem>>, vector<8x128xf32>
    %331 = arith.index_cast %328 : i32 to index
    %c0_65 = arith.constant 0 : index
    %332 = vector.load %arg7[%331, %c0_65] : memref<64x128xf32, #tpu.memory_space<vmem>>, vector<8x128xf32>
    %333 = vector.extract_strided_slice %330 {offsets = [0, 0], sizes = [8, 64], strides = [1, 1]} : vector<8x128xf32> to vector<8x64xf32>
    %334 = vector.extract_strided_slice %323 {offsets = [0, 0], sizes = [8, 64], strides = [1, 1]} : vector<8x256xf32> to vector<8x64xf32>
    %335 = arith.addf %333, %334 : vector<8x64xf32>
    %336 = arith.negf %335 : vector<8x64xf32>
    %337 = math.exp %336 : vector<8x64xf32>
    %cst_66 = arith.constant 1.000000e+00 : f32
    %338 = vector.broadcast %cst_66 : f32 to vector<8x64xf32>
    %339 = arith.addf %338, %337 : vector<8x64xf32>
    %340 = arith.divf %338, %339 : vector<8x64xf32>
    %341 = vector.extract_strided_slice %330 {offsets = [0, 64], sizes = [8, 32], strides = [1, 1]} : vector<8x128xf32> to vector<8x32xf32>
    %342 = vector.extract_strided_slice %340 {offsets = [0, 0], sizes = [8, 32], strides = [1, 1]} : vector<8x64xf32> to vector<8x32xf32>
    %343 = vector.extract_strided_slice %323 {offsets = [0, 64], sizes = [8, 32], strides = [1, 1]} : vector<8x256xf32> to vector<8x32xf32>
    %344 = arith.addf %343, %14 : vector<8x32xf32>
    %345 = arith.mulf %342, %344 : vector<8x32xf32>
    %346 = arith.addf %341, %345 : vector<8x32xf32>
    %347 = math.tanh %346 : vector<8x32xf32>
    %348 = vector.extract_strided_slice %340 {offsets = [0, 32], sizes = [8, 32], strides = [1, 1]} : vector<8x64xf32> to vector<8x32xf32>
    %349 = vector.extract_strided_slice %322 {offsets = [0, 0], sizes = [8, 32], strides = [1, 1]} : vector<8x64xf32> to vector<8x32xf32>
    %350 = arith.subf %349, %347 : vector<8x32xf32>
    %351 = arith.mulf %348, %350 : vector<8x32xf32>
    %352 = arith.addf %347, %351 : vector<8x32xf32>
    %353 = vector.extract_strided_slice %332 {offsets = [0, 0], sizes = [8, 64], strides = [1, 1]} : vector<8x128xf32> to vector<8x64xf32>
    %354 = vector.extract_strided_slice %323 {offsets = [0, 128], sizes = [8, 64], strides = [1, 1]} : vector<8x256xf32> to vector<8x64xf32>
    %355 = arith.addf %353, %354 : vector<8x64xf32>
    %356 = arith.negf %355 : vector<8x64xf32>
    %357 = math.exp %356 : vector<8x64xf32>
    %cst_67 = arith.constant 1.000000e+00 : f32
    %358 = vector.broadcast %cst_67 : f32 to vector<8x64xf32>
    %359 = arith.addf %358, %357 : vector<8x64xf32>
    %360 = arith.divf %358, %359 : vector<8x64xf32>
    %361 = vector.extract_strided_slice %332 {offsets = [0, 64], sizes = [8, 32], strides = [1, 1]} : vector<8x128xf32> to vector<8x32xf32>
    %362 = vector.extract_strided_slice %360 {offsets = [0, 0], sizes = [8, 32], strides = [1, 1]} : vector<8x64xf32> to vector<8x32xf32>
    %363 = vector.extract_strided_slice %323 {offsets = [0, 192], sizes = [8, 32], strides = [1, 1]} : vector<8x256xf32> to vector<8x32xf32>
    %364 = arith.addf %363, %15 : vector<8x32xf32>
    %365 = arith.mulf %362, %364 : vector<8x32xf32>
    %366 = arith.addf %361, %365 : vector<8x32xf32>
    %367 = math.tanh %366 : vector<8x32xf32>
    %368 = vector.extract_strided_slice %360 {offsets = [0, 32], sizes = [8, 32], strides = [1, 1]} : vector<8x64xf32> to vector<8x32xf32>
    %369 = vector.extract_strided_slice %322 {offsets = [0, 32], sizes = [8, 32], strides = [1, 1]} : vector<8x64xf32> to vector<8x32xf32>
    %370 = arith.subf %369, %367 : vector<8x32xf32>
    %371 = arith.mulf %368, %370 : vector<8x32xf32>
    %372 = arith.addf %367, %371 : vector<8x32xf32>
    %373 = tpu.concatenate %352, %372 in 1 : vector<8x32xf32>, vector<8x32xf32> -> vector<8x64xf32>
    %c7_i32_68 = arith.constant 7 : i32
    %cst_69 = arith.constant dense<0.000000e+00> : vector<8x256xf32>
    %374 = tpu.matmul %373, %10, %cst_69 {dimension_numbers = #tpu.dot_dimension_numbers<[1], [0], [0], [1], [0, 0, 1, 1], [], []>} : vector<8x64xf32>, vector<64x256xf32>, vector<8x256xf32> -> vector<8x256xf32>
    %c8_i32_70 = arith.constant 8 : i32
    %375 = arith.muli %c7_i32_68, %c8_i32_70 : i32
    %376 = tpu.assume_multiple %375, 8 : i32
    %c7_i32_71 = arith.constant 7 : i32
    %377 = arith.subi %c7_i32_71, %c7_i32_68 : i32
    %c8_i32_72 = arith.constant 8 : i32
    %378 = arith.muli %377, %c8_i32_72 : i32
    %379 = tpu.assume_multiple %378, 8 : i32
    %380 = arith.index_cast %376 : i32 to index
    %c0_73 = arith.constant 0 : index
    %381 = vector.load %arg6[%380, %c0_73] : memref<64x128xf32, #tpu.memory_space<vmem>>, vector<8x128xf32>
    %382 = arith.index_cast %379 : i32 to index
    %c0_74 = arith.constant 0 : index
    %383 = vector.load %arg7[%382, %c0_74] : memref<64x128xf32, #tpu.memory_space<vmem>>, vector<8x128xf32>
    %384 = vector.extract_strided_slice %381 {offsets = [0, 0], sizes = [8, 64], strides = [1, 1]} : vector<8x128xf32> to vector<8x64xf32>
    %385 = vector.extract_strided_slice %374 {offsets = [0, 0], sizes = [8, 64], strides = [1, 1]} : vector<8x256xf32> to vector<8x64xf32>
    %386 = arith.addf %384, %385 : vector<8x64xf32>
    %387 = arith.negf %386 : vector<8x64xf32>
    %388 = math.exp %387 : vector<8x64xf32>
    %cst_75 = arith.constant 1.000000e+00 : f32
    %389 = vector.broadcast %cst_75 : f32 to vector<8x64xf32>
    %390 = arith.addf %389, %388 : vector<8x64xf32>
    %391 = arith.divf %389, %390 : vector<8x64xf32>
    %392 = vector.extract_strided_slice %381 {offsets = [0, 64], sizes = [8, 32], strides = [1, 1]} : vector<8x128xf32> to vector<8x32xf32>
    %393 = vector.extract_strided_slice %391 {offsets = [0, 0], sizes = [8, 32], strides = [1, 1]} : vector<8x64xf32> to vector<8x32xf32>
    %394 = vector.extract_strided_slice %374 {offsets = [0, 64], sizes = [8, 32], strides = [1, 1]} : vector<8x256xf32> to vector<8x32xf32>
    %395 = arith.addf %394, %14 : vector<8x32xf32>
    %396 = arith.mulf %393, %395 : vector<8x32xf32>
    %397 = arith.addf %392, %396 : vector<8x32xf32>
    %398 = math.tanh %397 : vector<8x32xf32>
    %399 = vector.extract_strided_slice %391 {offsets = [0, 32], sizes = [8, 32], strides = [1, 1]} : vector<8x64xf32> to vector<8x32xf32>
    %400 = vector.extract_strided_slice %373 {offsets = [0, 0], sizes = [8, 32], strides = [1, 1]} : vector<8x64xf32> to vector<8x32xf32>
    %401 = arith.subf %400, %398 : vector<8x32xf32>
    %402 = arith.mulf %399, %401 : vector<8x32xf32>
    %403 = arith.addf %398, %402 : vector<8x32xf32>
    %404 = vector.extract_strided_slice %383 {offsets = [0, 0], sizes = [8, 64], strides = [1, 1]} : vector<8x128xf32> to vector<8x64xf32>
    %405 = vector.extract_strided_slice %374 {offsets = [0, 128], sizes = [8, 64], strides = [1, 1]} : vector<8x256xf32> to vector<8x64xf32>
    %406 = arith.addf %404, %405 : vector<8x64xf32>
    %407 = arith.negf %406 : vector<8x64xf32>
    %408 = math.exp %407 : vector<8x64xf32>
    %cst_76 = arith.constant 1.000000e+00 : f32
    %409 = vector.broadcast %cst_76 : f32 to vector<8x64xf32>
    %410 = arith.addf %409, %408 : vector<8x64xf32>
    %411 = arith.divf %409, %410 : vector<8x64xf32>
    %412 = vector.extract_strided_slice %383 {offsets = [0, 64], sizes = [8, 32], strides = [1, 1]} : vector<8x128xf32> to vector<8x32xf32>
    %413 = vector.extract_strided_slice %411 {offsets = [0, 0], sizes = [8, 32], strides = [1, 1]} : vector<8x64xf32> to vector<8x32xf32>
    %414 = vector.extract_strided_slice %374 {offsets = [0, 192], sizes = [8, 32], strides = [1, 1]} : vector<8x256xf32> to vector<8x32xf32>
    %415 = arith.addf %414, %15 : vector<8x32xf32>
    %416 = arith.mulf %413, %415 : vector<8x32xf32>
    %417 = arith.addf %412, %416 : vector<8x32xf32>
    %418 = math.tanh %417 : vector<8x32xf32>
    %419 = vector.extract_strided_slice %411 {offsets = [0, 32], sizes = [8, 32], strides = [1, 1]} : vector<8x64xf32> to vector<8x32xf32>
    %420 = vector.extract_strided_slice %373 {offsets = [0, 32], sizes = [8, 32], strides = [1, 1]} : vector<8x64xf32> to vector<8x32xf32>
    %421 = arith.subf %420, %418 : vector<8x32xf32>
    %422 = arith.mulf %419, %421 : vector<8x32xf32>
    %423 = arith.addf %418, %422 : vector<8x32xf32>
    %424 = tpu.concatenate %403, %423 in 1 : vector<8x32xf32>, vector<8x32xf32> -> vector<8x64xf32>
    %c8_i32_77 = arith.constant 8 : i32
    %425 = vector.extract_strided_slice %424 {offsets = [0, 0], sizes = [8, 32], strides = [1, 1]} : vector<8x64xf32> to vector<8x32xf32>
    %c0_78 = arith.constant 0 : index
    %c0_79 = arith.constant 0 : index
    %c0_80 = arith.constant 0 : index
    %426 = vector.load %arg5[%c0_78, %c0_79, %c0_80] : memref<2x8x32xf32, #tpu.memory_space<vmem>>, vector<1x8x32xf32>
    %427 = vector.shape_cast %426 : vector<1x8x32xf32> to vector<8x32xf32>
    %428 = vector.shape_cast %425 : vector<8x32xf32> to vector<1x8x32xf32>
    tpu.vector_store %arg5[%c0_78, %c0_79, %c0_80], %428 {strides = array<i32>} : memref<2x8x32xf32, #tpu.memory_space<vmem>>, vector<1x8x32xf32>,
    %429 = vector.extract_strided_slice %424 {offsets = [0, 32], sizes = [8, 32], strides = [1, 1]} : vector<8x64xf32> to vector<8x32xf32>
    %c1 = arith.constant 1 : index
    %c0_81 = arith.constant 0 : index
    %c0_82 = arith.constant 0 : index
    %430 = vector.load %arg5[%c1, %c0_81, %c0_82] : memref<2x8x32xf32, #tpu.memory_space<vmem>>, vector<1x8x32xf32>
    %431 = vector.shape_cast %430 : vector<1x8x32xf32> to vector<8x32xf32>
    %432 = vector.shape_cast %429 : vector<8x32xf32> to vector<1x8x32xf32>
    tpu.vector_store %arg5[%c1, %c0_81, %c0_82], %432 {strides = array<i32>} : memref<2x8x32xf32, #tpu.memory_space<vmem>>, vector<1x8x32xf32>,
    return
  }
}

</mosaic_0001>

<llo_original>
// kernel: tpu_custom_call.1
$region0: #{tpu_custom_call.1}
  #allocation0 [shape = 'u32[]', space=smem, size = 0x4, offset = 0x4, fixed_abs, tag = 'smem constant byte address 0x4 - core index']
  #allocation1 [shape = 'u32[144,128]{1,0:T(1,128)}', space=vmem, size = 0x12000, scoped, tag = 'internal scratch']
  #allocation2 [shape = 'f32[64,128]{1,0:T(8,128)}', space=vmem, size = 0x8000, scoped, tag = 'scratch operand']
  #allocation3 [shape = 'f32[64,128]{1,0:T(8,128)}', space=vmem, size = 0x8000, scoped, tag = 'scratch operand']
  %s0 = inlined_call_operand.vmem [shape: f32[64,16], index: 0, kind: input, shape index: {}]
  %s1 = inlined_call_operand.vmem [shape: f32[16,256], index: 1, kind: input, shape index: {}]
  %s2 = inlined_call_operand.hbm [shape: f32[64,256], index: 2, kind: input, shape index: {}]
  %s3 = inlined_call_operand.vmem [shape: f32[1,256], index: 3, kind: input, shape index: {}]
  %s4 = inlined_call_operand.vmem [shape: f32[1,64], index: 4, kind: input, shape index: {}]
  %s5 = inlined_call_operand.hbm [shape: f32[2,8,32], index: 5, kind: output, shape index: {}]
  %s6 = sld [smem:[#allocation0]]
  $region34: #{tpu_custom_call.1} parent=0
    _
  %s8 = ssub.s32 1, %s6
  %s9 = scalar_select 0, %s8, %s6
  $region1: #{tpu_custom_call.1} parent=0
    #allocation4 [shape = 'u8[65536]{0}', space=vmem, size = 0x10000, scoped, tag = 'input window, operand 2, single buffered']
    #allocation5 [shape = 's32[1]{0}', space=sflag, size = 0x4, scoped, tag = 'scoped memory for tpu_custom_call.1']
    #allocation6 [shape = 's32[1]{0}', space=sflag, size = 0x4, scoped, tag = 'scoped memory for tpu_custom_call.1']
    #allocation7 [shape = 'u8[8192]{0}', space=vmem, size = 0x2000, scoped, tag = 'output window, operand 0, single buffered']
    %10 = vsyncpa [#allocation5], 0
    %11 = vsyncpa [#allocation6], 0
    // Predicated region
    $region2: #{tpu_custom_call.1} parent=1 // pred_check
      _
    $region3: #{tpu_custom_call.1} parent=1 // pred_check_branch
      %13 = sbr.rel (0) target = $region5
    $region4: #{tpu_custom_call.1} parent=1 // pred_region
      _
    $region5: #{tpu_custom_call.1} parent=1 // pred_fallthru
      _
    // Predicated region
    $region6: #{tpu_custom_call.1} parent=1 // pred_check
      _
    $region7: #{tpu_custom_call.1} parent=1 // pred_check_branch
      %15 = sbr.rel (0) target = $region9
    $region8: #{tpu_custom_call.1} parent=1 // pred_region
      _
    $region9: #{tpu_custom_call.1} parent=1 // pred_fallthru
      _
    // Predicated region
    $region10: #{tpu_custom_call.1} parent=1 // pred_check
      _
    $region11: #{tpu_custom_call.1} parent=1 // pred_check_branch
      %17 = sbr.rel (0) target = $region13
    $region12: #{tpu_custom_call.1} parent=1 // pred_region
      %s19 = ssub.s32 2048, 2048
      %20 = vsyncadd [#allocation5], %s19
      %s21 = sshll.u32 [#allocation4], 4
      %s22 = int_to_ptr.vmem [resolvable:$true] %s21
      %27 = dma.hbm_to_vmem [thread:$0]  %s2, 2048, %s22, [#allocation5], 256, 256, 16
    $region13: #{tpu_custom_call.1} parent=1 // pred_fallthru
      _
    // Predicated region
    $region14: #{tpu_custom_call.1} parent=1 // pred_check
      _
    $region15: #{tpu_custom_call.1} parent=1 // pred_check_branch
      %29 = sbr.rel (0) target = $region17
    $region16: #{tpu_custom_call.1} parent=1 // pred_region
      _
    $region17: #{tpu_custom_call.1} parent=1 // pred_fallthru
      _
    // Predicated region
    $region18: #{tpu_custom_call.1} parent=1 // pred_check
      _
    $region19: #{tpu_custom_call.1} parent=1 // pred_check_branch
      %31 = sbr.rel (0) target = $region21
    $region20: #{tpu_custom_call.1} parent=1 // pred_region
      _
    $region21: #{tpu_custom_call.1} parent=1 // pred_fallthru
      _
    // Predicated region
    $region22: #{tpu_custom_call.1} parent=1 // pred_check
      _
    $region23: #{tpu_custom_call.1} parent=1 // pred_check_branch
      %33 = sbr.rel (0) target = $region25
    $region24: #{tpu_custom_call.1} parent=1 // pred_region
      %34 = dma.done [#allocation5], 2048
    $region25: #{tpu_custom_call.1} parent=1 // pred_fallthru
      _
    %v35 = vld [vmem:[%s0] sm:$0xff]
    %v36 = vld [vmem:[%s0 + $0x8] sm:$0xff]
    %v37 = vld [vmem:[%s0 + $0x10] sm:$0xff]
    %v38 = vld [vmem:[%s0 + $0x18] sm:$0xff]
    %v39 = vld [vmem:[%s0 + $0x20] sm:$0xff]
    %v40 = vld [vmem:[%s0 + $0x28] sm:$0xff]
    %v41 = vld [vmem:[%s0 + $0x30] sm:$0xff]
    %v42 = vld [vmem:[%s0 + $0x38] sm:$0xff]
    %v43 = vld [vmem:[%s1] sm:$0xff]
    %v44 = vld [vmem:[%s1 + $0x8] sm:$0xff]
    %v45 = vld [vmem:[%s1 + $0x10] sm:$0xff]
    %v46 = vld [vmem:[%s1 + $0x18] sm:$0xff]
    %v47 = vld [vmem:[%s3] sm:$0x3]
    %v49 = vlaneseq
    %v50 = vshrl.u32 %v49, 7
    %v51 = vsub.s32 0, %v50
    %v52 = vrot.slane %v47, %v51
    %v53 = vlaneseq
    %v54 = vshrl.u32 %v53, 7
    %v55 = vsub.s32 1, %v54
    %v56 = vrot.slane %v47, %v55
    %vm59 = vcmask 130048
    %v61 = vsel %vm59, %v35, 0
    %v64 = vsel %vm59, %v36, 0
    %v67 = vsel %vm59, %v37, 0
    %v70 = vsel %vm59, %v38, 0
    %v73 = vsel %vm59, %v39, 0
    %v76 = vsel %vm59, %v40, 0
    %v79 = vsel %vm59, %v41, 0
    %v82 = vsel %vm59, %v42, 0
    %84 = vmatprep.subr.mxu0 0.0
    %85 = vmatpush1.msra.mxu0 0.0
    %86 = vmatprep.subr.mxu0 0.0
    %87 = vmatpush1.msra.mxu0 0.0
    %88 = vmatprep.subr.mxu0 0.0
    %89 = vmatpush1.msra.mxu0 0.0
    %90 = vmatprep.subr.mxu0 0.0
    %91 = vmatpush1.msra.mxu0 0.0
    %92 = vmatprep.subr.mxu0 0.0
    %93 = vmatpush1.msra.mxu0 0.0
    %94 = vmatprep.subr.mxu0 0.0
    %95 = vmatpush1.msra.mxu0 0.0
    %96 = vmatprep.subr.mxu0 0.0
    %97 = vmatpush1.msra.mxu0 0.0
    %98 = vmatprep.subr.mxu0 0.0
    %99 = vmatpush1.msra.mxu0 0.0
    %100 = vmatprep.subr.mxu0 0.0
    %101 = vmatpush1.msra.mxu0 0.0
    %102 = vmatprep.subr.mxu0 0.0
    %103 = vmatpush1.msra.mxu0 0.0
    %104 = vmatprep.subr.mxu0 0.0
    %105 = vmatpush1.msra.mxu0 0.0
    %106 = vmatprep.subr.mxu0 0.0
    %107 = vmatpush1.msra.mxu0 0.0
    %108 = vmatprep.subr.mxu0 0.0
    %109 = vmatpush1.msra.mxu0 0.0
    %110 = vmatprep.subr.mxu0 0.0
    %111 = vmatpush1.msra.mxu0 0.0
    %112 = vmatprep.subr.mxu0 %v46
    %113 = vmatpush1.msra.mxu0 %v45
    %114 = vmatprep.subr.mxu0 %v44
    %115 = vmatpush1.msra.mxu0 %v43
    %116 = vmatprep.subr.mxu0 0.0
    %117 = vmatpush2.msra.mxu0 0.0
    %118 = vmatprep.subr.mxu0 0.0
    %119 = vmatpush2.msra.mxu0 0.0
    %120 = vmatprep.subr.mxu0 0.0
    %121 = vmatpush2.msra.mxu0 0.0
    %122 = vmatprep.subr.mxu0 0.0
    %123 = vmatpush2.msra.mxu0 0.0
    %124 = vmatprep.subr.mxu0 0.0
    %125 = vmatpush2.msra.mxu0 0.0
    %126 = vmatprep.subr.mxu0 0.0
    %127 = vmatpush2.msra.mxu0 0.0
    %128 = vmatprep.subr.mxu0 0.0
    %129 = vmatpush2.msra.mxu0 0.0
    %130 = vmatprep.subr.mxu0 0.0
    %131 = vmatpush2.msra.mxu0 0.0
    %132 = vmatprep.subr.mxu0 0.0
    %133 = vmatpush2.msra.mxu0 0.0
    %134 = vmatprep.subr.mxu0 0.0
    %135 = vmatpush2.msra.mxu0 0.0
    %136 = vmatprep.subr.mxu0 0.0
    %137 = vmatpush2.msra.mxu0 0.0
    %138 = vmatprep.subr.mxu0 0.0
    %139 = vmatpush2.msra.mxu0 0.0
    %140 = vmatprep.subr.mxu0 0.0
    %141 = vmatpush2.msra.mxu0 0.0
    %142 = vmatprep.subr.mxu0 0.0
    %143 = vmatpush2.msra.mxu0 0.0
    %144 = vmatprep.subr.mxu0 0.0
    %145 = vmatpush2.msra.mxu0 0.0
    %146 = vmatprep.subr.mxu0 0.0
    %147 = vmatpush2.msra.mxu0 0.0
    %148 = vmatprep.mubr.f32.mxu0 0.0
    %149 = vmatmul.mubr.f32.gmra.mxu0 %v61
    %v150 = vpop.f32.mrf.mxu0
    %v151 = vadd.f32 %v52, %v150
    %v152 = vpop.f32.mrf.mxu0
    %v153 = vadd.f32 %v56, %v152
    %154 = vmatprep.mubr.f32.mxu0 0.0
    %155 = vmatmul.mubr.f32.gmra.mxu0 %v64
    %v156 = vpop.f32.mrf.mxu0
    %v157 = vadd.f32 %v52, %v156
    %v158 = vpop.f32.mrf.mxu0
    %v159 = vadd.f32 %v56, %v158
    %160 = vmatprep.mubr.f32.mxu0 0.0
    %161 = vmatmul.mubr.f32.gmra.mxu0 %v67
    %v162 = vpop.f32.mrf.mxu0
    %v163 = vadd.f32 %v52, %v162
    %v164 = vpop.f32.mrf.mxu0
    %v165 = vadd.f32 %v56, %v164
    %166 = vmatprep.mubr.f32.mxu0 0.0
    %167 = vmatmul.mubr.f32.gmra.mxu0 %v70
    %v168 = vpop.f32.mrf.mxu0
    %v169 = vadd.f32 %v52, %v168
    %v170 = vpop.f32.mrf.mxu0
    %v171 = vadd.f32 %v56, %v170
    %172 = vmatprep.mubr.f32.mxu0 0.0
    %173 = vmatmul.mubr.f32.gmra.mxu0 %v73
    %v174 = vpop.f32.mrf.mxu0
    %v175 = vadd.f32 %v52, %v174
    %v176 = vpop.f32.mrf.mxu0
    %v177 = vadd.f32 %v56, %v176
    %178 = vmatprep.mubr.f32.mxu0 0.0
    %179 = vmatmul.mubr.f32.gmra.mxu0 %v76
    %v180 = vpop.f32.mrf.mxu0
    %v181 = vadd.f32 %v52, %v180
    %v182 = vpop.f32.mrf.mxu0
    %v183 = vadd.f32 %v56, %v182
    %184 = vmatprep.mubr.f32.mxu0 0.0
    %185 = vmatmul.mubr.f32.gmra.mxu0 %v79
    %v186 = vpop.f32.mrf.mxu0
    %v187 = vadd.f32 %v52, %v186
    %v188 = vpop.f32.mrf.mxu0
    %v189 = vadd.f32 %v56, %v188
    %190 = vmatprep.mubr.f32.mxu0 0.0
    %191 = vmatmul.mubr.f32.gmra.mxu0 %v82
    %v192 = vpop.f32.mrf.mxu0
    %v193 = vadd.f32 %v52, %v192
    %v194 = vpop.f32.mrf.mxu0
    %v195 = vadd.f32 %v56, %v194
    %196 = vdwg.mxu0
    %197 = vst [vmem:[#allocation2] sm:$0xff] %v151
    %198 = vst [vmem:[#allocation2 + $0x8] sm:$0xff] %v157
    %199 = vst [vmem:[#allocation2 + $0x10] sm:$0xff] %v163
    %200 = vst [vmem:[#allocation2 + $0x18] sm:$0xff] %v169
    %201 = vst [vmem:[#allocation2 + $0x20] sm:$0xff] %v175
    %202 = vst [vmem:[#allocation2 + $0x28] sm:$0xff] %v181
    %203 = vst [vmem:[#allocation2 + $0x30] sm:$0xff] %v187
    %204 = vst [vmem:[#allocation2 + $0x38] sm:$0xff] %v193
    %205 = vst [vmem:[#allocation3] sm:$0xff] %v153
    %206 = vst [vmem:[#allocation3 + $0x8] sm:$0xff] %v159
    %207 = vst [vmem:[#allocation3 + $0x10] sm:$0xff] %v165
    %208 = vst [vmem:[#allocation3 + $0x18] sm:$0xff] %v171
    %209 = vst [vmem:[#allocation3 + $0x20] sm:$0xff] %v177
    %210 = vst [vmem:[#allocation3 + $0x28] sm:$0xff] %v183
    %211 = vst [vmem:[#allocation3 + $0x30] sm:$0xff] %v189
    %212 = vst [vmem:[#allocation3 + $0x38] sm:$0xff] %v195
    %v213 = vld [vmem:[#allocation4] sm:$0xff]
    %v214 = vld [vmem:[#allocation4 + $0x8] sm:$0xff]
    %v215 = vld [vmem:[#allocation4 + $0x10] sm:$0xff]
    %v216 = vld [vmem:[#allocation4 + $0x18] sm:$0xff]
    %v217 = vld [vmem:[#allocation4 + $0x20] sm:$0xff]
    %v218 = vld [vmem:[#allocation4 + $0x28] sm:$0xff]
    %v219 = vld [vmem:[#allocation4 + $0x30] sm:$0xff]
    %v220 = vld [vmem:[#allocation4 + $0x38] sm:$0xff]
    %v221 = vld [vmem:[#allocation4 + $0x40] sm:$0xff]
    %v222 = vld [vmem:[#allocation4 + $0x48] sm:$0xff]
    %v223 = vld [vmem:[#allocation4 + $0x50] sm:$0xff]
    %v224 = vld [vmem:[#allocation4 + $0x58] sm:$0xff]
    %v225 = vld [vmem:[#allocation4 + $0x60] sm:$0xff]
    %v226 = vld [vmem:[#allocation4 + $0x68] sm:$0xff]
    %v227 = vld [vmem:[#allocation4 + $0x70] sm:$0xff]
    %v228 = vld [vmem:[#allocation4 + $0x78] sm:$0xff]
    %v229 = vld [vmem:[%s4] sm:$0x1]
    %v231 = vlaneseq
    %v232 = vshrl.u32 %v231, 7
    %v233 = vsub.s32 0, %v232
    %v234 = vrot.slane %v229, %v233
    %vm235 = vcmask 523264
    %v237 = vsel %vm235, 0.0, 0
    %239 = vmatprep.subr.mxu0 0.0
    %240 = vmatpush1.msra.mxu0 0.0
    %241 = vmatprep.subr.mxu0 0.0
    %242 = vmatpush1.msra.mxu0 0.0
    %243 = vmatprep.subr.mxu0 0.0
    %244 = vmatpush1.msra.mxu0 0.0
    %245 = vmatprep.subr.mxu0 0.0
    %246 = vmatpush1.msra.mxu0 0.0
    %247 = vmatprep.subr.mxu0 0.0
    %248 = vmatpush1.msra.mxu0 0.0
    %249 = vmatprep.subr.mxu0 0.0
    %250 = vmatpush1.msra.mxu0 0.0
    %251 = vmatprep.subr.mxu0 0.0
    %252 = vmatpush1.msra.mxu0 0.0
    %253 = vmatprep.subr.mxu0 0.0
    %254 = vmatpush1.msra.mxu0 0.0
    %255 = vmatprep.subr.mxu0 %v228
    %256 = vmatpush1.msra.mxu0 %v227
    %257 = vmatprep.subr.mxu0 %v226
    %258 = vmatpush1.msra.mxu0 %v225
    %259 = vmatprep.subr.mxu0 %v224
    %260 = vmatpush1.msra.mxu0 %v223
    %261 = vmatprep.subr.mxu0 %v222
    %262 = vmatpush1.msra.mxu0 %v221
    %263 = vmatprep.subr.mxu0 %v220
    %264 = vmatpush1.msra.mxu0 %v219
    %265 = vmatprep.subr.mxu0 %v218
    %266 = vmatpush1.msra.mxu0 %v217
    %267 = vmatprep.subr.mxu0 %v216
    %268 = vmatpush1.msra.mxu0 %v215
    %269 = vmatprep.subr.mxu0 %v214
    %270 = vmatpush1.msra.mxu0 %v213
    %271 = vmatprep.subr.mxu0 0.0
    %272 = vmatpush2.msra.mxu0 0.0
    %273 = vmatprep.subr.mxu0 0.0
    %274 = vmatpush2.msra.mxu0 0.0
    %275 = vmatprep.subr.mxu0 0.0
    %276 = vmatpush2.msra.mxu0 0.0
    %277 = vmatprep.subr.mxu0 0.0
    %278 = vmatpush2.msra.mxu0 0.0
    %279 = vmatprep.subr.mxu0 0.0
    %280 = vmatpush2.msra.mxu0 0.0
    %281 = vmatprep.subr.mxu0 0.0
    %282 = vmatpush2.msra.mxu0 0.0
    %283 = vmatprep.subr.mxu0 0.0
    %284 = vmatpush2.msra.mxu0 0.0
    %285 = vmatprep.subr.mxu0 0.0
    %286 = vmatpush2.msra.mxu0 0.0
    %287 = vmatprep.subr.mxu0 0.0
    %288 = vmatpush2.msra.mxu0 0.0
    %289 = vmatprep.subr.mxu0 0.0
    %290 = vmatpush2.msra.mxu0 0.0
    %291 = vmatprep.subr.mxu0 0.0
    %292 = vmatpush2.msra.mxu0 0.0
    %293 = vmatprep.subr.mxu0 0.0
    %294 = vmatpush2.msra.mxu0 0.0
    %295 = vmatprep.subr.mxu0 0.0
    %296 = vmatpush2.msra.mxu0 0.0
    %297 = vmatprep.subr.mxu0 0.0
    %298 = vmatpush2.msra.mxu0 0.0
    %299 = vmatprep.subr.mxu0 0.0
    %300 = vmatpush2.msra.mxu0 0.0
    %301 = vmatprep.subr.mxu0 0.0
    %302 = vmatpush2.msra.mxu0 0.0
    %303 = vmatprep.mubr.f32.mxu0 0.0
    %304 = vmatmul.mubr.f32.gmra.mxu0 %v237
    %v305 = vpop.f32.mrf.mxu0
    %v306 = vadd.f32 0.0, %v305
    %v307 = vpop.f32.mrf.mxu0
    %v308 = vadd.f32 0.0, %v307
    %309 = vdwg.mxu0
    %v310 = vld [vmem:[#allocation2] sm:$0xff]
    %s311 = scalar_lea.vmem [#allocation3], 56
    %v312 = vld [vmem:[%s311] sm:$0xff]
    %v313 = vadd.f32 %v310, %v306
    %v314 = vxor.u32 %v313, 2147483648
    %v315 = vmul.f32 %v314, 1.442695
    %v316 = vpow.pop %v315
    %v317 = vadd.f32 %v316, 1.0
    %v318 = vrcp.pop %v317
    %v319 = vmul.f32 1.0, %v318
    %320 = vrot.lane.b32.xlu0 %v234, 64
    %v321 = vpop.permute.xlu0 %320
    %v323 = vadd.f32 %v306, %v321
    %325 = vrot.lane.b32.xlu0 %v323, 64
    %v326 = vpop.permute.xlu0 %325
    %v328 = vmul.f32 %v319, %v326
    %330 = vrot.lane.b32.xlu0 %v328, 64
    %v331 = vpop.permute.xlu0 %330
    %v333 = vadd.f32 %v310, %v331
    %v334 = vtanh.pop %v333
    %v335 = vsub.f32 0.0, %v334
    %337 = vrot.lane.b32.xlu0 %v335, 96
    %v338 = vpop.permute.xlu0 %337
    %v340 = vmul.f32 %v319, %v338
    %342 = vrot.lane.b32.xlu0 %v340, 32
    %v343 = vpop.permute.xlu0 %342
    %v345 = vadd.f32 %v334, %v343
    %v346 = vadd.f32 %v312, %v308
    %v347 = vxor.u32 %v346, 2147483648
    %v348 = vmul.f32 %v347, 1.442695
    %v349 = vpow.pop %v348
    %v350 = vadd.f32 %v349, 1.0
    %v351 = vrcp.pop %v350
    %v352 = vmul.f32 1.0, %v351
    %353 = vrot.lane.b32.xlu0 %v234, 32
    %v354 = vpop.permute.xlu0 %353
    %v356 = vadd.f32 %v308, %v354
    %358 = vrot.lane.b32.xlu0 %v356, 64
    %v359 = vpop.permute.xlu0 %358
    %v361 = vmul.f32 %v352, %v359
    %363 = vrot.lane.b32.xlu0 %v361, 64
    %v364 = vpop.permute.xlu0 %363
    %v366 = vadd.f32 %v312, %v364
    %v367 = vtanh.pop %v366
    %v368 = vsub.f32 0.0, %v367
    %370 = vrot.lane.b32.xlu0 %v368, 96
    %v371 = vpop.permute.xlu0 %370
    %v373 = vmul.f32 %v352, %v371
    %375 = vrot.lane.b32.xlu0 %v373, 32
    %v376 = vpop.permute.xlu0 %375
    %v378 = vadd.f32 %v367, %v376
    %380 = vrot.lane.b32.xlu0 %v345, 64
    %v381 = vpop.permute.xlu0 %380
    %384 = vrot.lane.b32.xlu0 %v378, 96
    %v385 = vpop.permute.xlu0 %384
    %vm387 = vcmask 261120
    %v388 = vsel %vm387, %v381, %v385
    %v390 = vsel %vm235, %v388, 0
    %392 = vmatprep.subr.mxu0 0.0
    %393 = vmatpush1.msra.mxu0 0.0
    %394 = vmatprep.subr.mxu0 0.0
    %395 = vmatpush1.msra.mxu0 0.0
    %396 = vmatprep.subr.mxu0 0.0
    %397 = vmatpush1.msra.mxu0 0.0
    %398 = vmatprep.subr.mxu0 0.0
    %399 = vmatpush1.msra.mxu0 0.0
    %400 = vmatprep.subr.mxu0 0.0
    %401 = vmatpush1.msra.mxu0 0.0
    %402 = vmatprep.subr.mxu0 0.0
    %403 = vmatpush1.msra.mxu0 0.0
    %404 = vmatprep.subr.mxu0 0.0
    %405 = vmatpush1.msra.mxu0 0.0
    %406 = vmatprep.subr.mxu0 0.0
    %407 = vmatpush1.msra.mxu0 0.0
    %408 = vmatprep.subr.mxu0 %v228
    %409 = vmatpush1.msra.mxu0 %v227
    %410 = vmatprep.subr.mxu0 %v226
    %411 = vmatpush1.msra.mxu0 %v225
    %412 = vmatprep.subr.mxu0 %v224
    %413 = vmatpush1.msra.mxu0 %v223
    %414 = vmatprep.subr.mxu0 %v222
    %415 = vmatpush1.msra.mxu0 %v221
    %416 = vmatprep.subr.mxu0 %v220
    %417 = vmatpush1.msra.mxu0 %v219
    %418 = vmatprep.subr.mxu0 %v218
    %419 = vmatpush1.msra.mxu0 %v217
    %420 = vmatprep.subr.mxu0 %v216
    %421 = vmatpush1.msra.mxu0 %v215
    %422 = vmatprep.subr.mxu0 %v214
    %423 = vmatpush1.msra.mxu0 %v213
    %424 = vmatprep.subr.mxu0 0.0
    %425 = vmatpush2.msra.mxu0 0.0
    %426 = vmatprep.subr.mxu0 0.0
    %427 = vmatpush2.msra.mxu0 0.0
    %428 = vmatprep.subr.mxu0 0.0
    %429 = vmatpush2.msra.mxu0 0.0
    %430 = vmatprep.subr.mxu0 0.0
    %431 = vmatpush2.msra.mxu0 0.0
    %432 = vmatprep.subr.mxu0 0.0
    %433 = vmatpush2.msra.mxu0 0.0
    %434 = vmatprep.subr.mxu0 0.0
    %435 = vmatpush2.msra.mxu0 0.0
    %436 = vmatprep.subr.mxu0 0.0
    %437 = vmatpush2.msra.mxu0 0.0
    %438 = vmatprep.subr.mxu0 0.0
    %439 = vmatpush2.msra.mxu0 0.0
    %440 = vmatprep.subr.mxu0 0.0
    %441 = vmatpush2.msra.mxu0 0.0
    %442 = vmatprep.subr.mxu0 0.0
    %443 = vmatpush2.msra.mxu0 0.0
    %444 = vmatprep.subr.mxu0 0.0
    %445 = vmatpush2.msra.mxu0 0.0
    %446 = vmatprep.subr.mxu0 0.0
    %447 = vmatpush2.msra.mxu0 0.0
    %448 = vmatprep.subr.mxu0 0.0
    %449 = vmatpush2.msra.mxu0 0.0
    %450 = vmatprep.subr.mxu0 0.0
    %451 = vmatpush2.msra.mxu0 0.0
    %452 = vmatprep.subr.mxu0 0.0
    %453 = vmatpush2.msra.mxu0 0.0
    %454 = vmatprep.subr.mxu0 0.0
    %455 = vmatpush2.msra.mxu0 0.0
    %456 = vmatprep.mubr.f32.mxu0 0.0
    %457 = vmatmul.mubr.f32.gmra.mxu0 %v390
    %v458 = vpop.f32.mrf.mxu0
    %v459 = vadd.f32 0.0, %v458
    %v460 = vpop.f32.mrf.mxu0
    %v461 = vadd.f32 0.0, %v460
    %462 = vdwg.mxu0
    %s463 = scalar_lea.vmem [#allocation2], 8
    %v464 = vld [vmem:[%s463] sm:$0xff]
    %s465 = scalar_lea.vmem [#allocation3], 48
    %v466 = vld [vmem:[%s465] sm:$0xff]
    %v467 = vadd.f32 %v464, %v459
    %v468 = vxor.u32 %v467, 2147483648
    %v469 = vmul.f32 %v468, 1.442695
    %v470 = vpow.pop %v469
    %v471 = vadd.f32 %v470, 1.0
    %v472 = vrcp.pop %v471
    %v473 = vmul.f32 1.0, %v472
    %v474 = vadd.f32 %v459, %v321
    %476 = vrot.lane.b32.xlu0 %v474, 64
    %v477 = vpop.permute.xlu0 %476
    %v479 = vmul.f32 %v473, %v477
    %481 = vrot.lane.b32.xlu0 %v479, 64
    %v482 = vpop.permute.xlu0 %481
    %v484 = vadd.f32 %v464, %v482
    %v485 = vtanh.pop %v484
    %487 = vrot.lane.b32.xlu0 %v485, 64
    %v488 = vpop.permute.xlu0 %487
    %v490 = vsub.f32 %v388, %v488
    %492 = vrot.lane.b32.xlu0 %v490, 32
    %v493 = vpop.permute.xlu0 %492
    %v495 = vmul.f32 %v473, %v493
    %497 = vrot.lane.b32.xlu0 %v495, 32
    %v498 = vpop.permute.xlu0 %497
    %v500 = vadd.f32 %v485, %v498
    %v501 = vadd.f32 %v466, %v461
    %v502 = vxor.u32 %v501, 2147483648
    %v503 = vmul.f32 %v502, 1.442695
    %v504 = vpow.pop %v503
    %v505 = vadd.f32 %v504, 1.0
    %v506 = vrcp.pop %v505
    %v507 = vmul.f32 1.0, %v506
    %v508 = vadd.f32 %v461, %v354
    %510 = vrot.lane.b32.xlu0 %v508, 64
    %v511 = vpop.permute.xlu0 %510
    %v513 = vmul.f32 %v507, %v511
    %515 = vrot.lane.b32.xlu0 %v513, 64
    %v516 = vpop.permute.xlu0 %515
    %v518 = vadd.f32 %v466, %v516
    %v519 = vtanh.pop %v518
    %521 = vrot.lane.b32.xlu0 %v519, 96
    %v522 = vpop.permute.xlu0 %521
    %v524 = vsub.f32 %v388, %v522
    %v525 = vmul.f32 %v507, %v524
    %527 = vrot.lane.b32.xlu0 %v525, 32
    %v528 = vpop.permute.xlu0 %527
    %v530 = vadd.f32 %v519, %v528
    %532 = vrot.lane.b32.xlu0 %v500, 64
    %v533 = vpop.permute.xlu0 %532
    %536 = vrot.lane.b32.xlu0 %v530, 96
    %v537 = vpop.permute.xlu0 %536
    %v539 = vsel %vm387, %v533, %v537
    %v541 = vsel %vm235, %v539, 0
    %543 = vmatprep.subr.mxu0 0.0
    %544 = vmatpush1.msra.mxu0 0.0
    %545 = vmatprep.subr.mxu0 0.0
    %546 = vmatpush1.msra.mxu0 0.0
    %547 = vmatprep.subr.mxu0 0.0
    %548 = vmatpush1.msra.mxu0 0.0
    %549 = vmatprep.subr.mxu0 0.0
    %550 = vmatpush1.msra.mxu0 0.0
    %551 = vmatprep.subr.mxu0 0.0
    %552 = vmatpush1.msra.mxu0 0.0
    %553 = vmatprep.subr.mxu0 0.0
    %554 = vmatpush1.msra.mxu0 0.0
    %555 = vmatprep.subr.mxu0 0.0
    %556 = vmatpush1.msra.mxu0 0.0
    %557 = vmatprep.subr.mxu0 0.0
    %558 = vmatpush1.msra.mxu0 0.0
    %559 = vmatprep.subr.mxu0 %v228
    %560 = vmatpush1.msra.mxu0 %v227
    %561 = vmatprep.subr.mxu0 %v226
    %562 = vmatpush1.msra.mxu0 %v225
    %563 = vmatprep.subr.mxu0 %v224
    %564 = vmatpush1.msra.mxu0 %v223
    %565 = vmatprep.subr.mxu0 %v222
    %566 = vmatpush1.msra.mxu0 %v221
    %567 = vmatprep.subr.mxu0 %v220
    %568 = vmatpush1.msra.mxu0 %v219
    %569 = vmatprep.subr.mxu0 %v218
    %570 = vmatpush1.msra.mxu0 %v217
    %571 = vmatprep.subr.mxu0 %v216
    %572 = vmatpush1.msra.mxu0 %v215
    %573 = vmatprep.subr.mxu0 %v214
    %574 = vmatpush1.msra.mxu0 %v213
    %575 = vmatprep.subr.mxu0 0.0
    %576 = vmatpush2.msra.mxu0 0.0
    %577 = vmatprep.subr.mxu0 0.0
    %578 = vmatpush2.msra.mxu0 0.0
    %579 = vmatprep.subr.mxu0 0.0
    %580 = vmatpush2.msra.mxu0 0.0
    %581 = vmatprep.subr.mxu0 0.0
    %582 = vmatpush2.msra.mxu0 0.0
    %583 = vmatprep.subr.mxu0 0.0
    %584 = vmatpush2.msra.mxu0 0.0
    %585 = vmatprep.subr.mxu0 0.0
    %586 = vmatpush2.msra.mxu0 0.0
    %587 = vmatprep.subr.mxu0 0.0
    %588 = vmatpush2.msra.mxu0 0.0
    %589 = vmatprep.subr.mxu0 0.0
    %590 = vmatpush2.msra.mxu0 0.0
    %591 = vmatprep.subr.mxu0 0.0
    %592 = vmatpush2.msra.mxu0 0.0
    %593 = vmatprep.subr.mxu0 0.0
    %594 = vmatpush2.msra.mxu0 0.0
    %595 = vmatprep.subr.mxu0 0.0
    %596 = vmatpush2.msra.mxu0 0.0
    %597 = vmatprep.subr.mxu0 0.0
    %598 = vmatpush2.msra.mxu0 0.0
    %599 = vmatprep.subr.mxu0 0.0
    %600 = vmatpush2.msra.mxu0 0.0
    %601 = vmatprep.subr.mxu0 0.0
    %602 = vmatpush2.msra.mxu0 0.0
    %603 = vmatprep.subr.mxu0 0.0
    %604 = vmatpush2.msra.mxu0 0.0
    %605 = vmatprep.subr.mxu0 0.0
    %606 = vmatpush2.msra.mxu0 0.0
    %607 = vmatprep.mubr.f32.mxu0 0.0
    %608 = vmatmul.mubr.f32.gmra.mxu0 %v541
    %v609 = vpop.f32.mrf.mxu0
    %v610 = vadd.f32 0.0, %v609
    %v611 = vpop.f32.mrf.mxu0
    %v612 = vadd.f32 0.0, %v611
    %613 = vdwg.mxu0
    %s614 = scalar_lea.vmem [#allocation2], 16
    %v615 = vld [vmem:[%s614] sm:$0xff]
    %s616 = scalar_lea.vmem [#allocation3], 40
    %v617 = vld [vmem:[%s616] sm:$0xff]
    %v618 = vadd.f32 %v615, %v610
    %v619 = vxor.u32 %v618, 2147483648
    %v620 = vmul.f32 %v619, 1.442695
    %v621 = vpow.pop %v620
    %v622 = vadd.f32 %v621, 1.0
    %v623 = vrcp.pop %v622
    %v624 = vmul.f32 1.0, %v623
    %v625 = vadd.f32 %v610, %v321
    %627 = vrot.lane.b32.xlu0 %v625, 64
    %v628 = vpop.permute.xlu0 %627
    %v630 = vmul.f32 %v624, %v628
    %632 = vrot.lane.b32.xlu0 %v630, 64
    %v633 = vpop.permute.xlu0 %632
    %v635 = vadd.f32 %v615, %v633
    %v636 = vtanh.pop %v635
    %638 = vrot.lane.b32.xlu0 %v636, 64
    %v639 = vpop.permute.xlu0 %638
    %v641 = vsub.f32 %v539, %v639
    %643 = vrot.lane.b32.xlu0 %v641, 32
    %v644 = vpop.permute.xlu0 %643
    %v646 = vmul.f32 %v624, %v644
    %648 = vrot.lane.b32.xlu0 %v646, 32
    %v649 = vpop.permute.xlu0 %648
    %v651 = vadd.f32 %v636, %v649
    %v652 = vadd.f32 %v617, %v612
    %v653 = vxor.u32 %v652, 2147483648
    %v654 = vmul.f32 %v653, 1.442695
    %v655 = vpow.pop %v654
    %v656 = vadd.f32 %v655, 1.0
    %v657 = vrcp.pop %v656
    %v658 = vmul.f32 1.0, %v657
    %v659 = vadd.f32 %v612, %v354
    %661 = vrot.lane.b32.xlu0 %v659, 64
    %v662 = vpop.permute.xlu0 %661
    %v664 = vmul.f32 %v658, %v662
    %666 = vrot.lane.b32.xlu0 %v664, 64
    %v667 = vpop.permute.xlu0 %666
    %v669 = vadd.f32 %v617, %v667
    %v670 = vtanh.pop %v669
    %672 = vrot.lane.b32.xlu0 %v670, 96
    %v673 = vpop.permute.xlu0 %672
    %v675 = vsub.f32 %v539, %v673
    %v676 = vmul.f32 %v658, %v675
    %678 = vrot.lane.b32.xlu0 %v676, 32
    %v679 = vpop.permute.xlu0 %678
    %v681 = vadd.f32 %v670, %v679
    %683 = vrot.lane.b32.xlu0 %v651, 64
    %v684 = vpop.permute.xlu0 %683
    %687 = vrot.lane.b32.xlu0 %v681, 96
    %v688 = vpop.permute.xlu0 %687
    %v690 = vsel %vm387, %v684, %v688
    %v692 = vsel %vm235, %v690, 0
    %694 = vmatprep.subr.mxu0 0.0
    %695 = vmatpush1.msra.mxu0 0.0
    %696 = vmatprep.subr.mxu0 0.0
    %697 = vmatpush1.msra.mxu0 0.0
    %698 = vmatprep.subr.mxu0 0.0
    %699 = vmatpush1.msra.mxu0 0.0
    %700 = vmatprep.subr.mxu0 0.0
    %701 = vmatpush1.msra.mxu0 0.0
    %702 = vmatprep.subr.mxu0 0.0
    %703 = vmatpush1.msra.mxu0 0.0
    %704 = vmatprep.subr.mxu0 0.0
    %705 = vmatpush1.msra.mxu0 0.0
    %706 = vmatprep.subr.mxu0 0.0
    %707 = vmatpush1.msra.mxu0 0.0
    %708 = vmatprep.subr.mxu0 0.0
    %709 = vmatpush1.msra.mxu0 0.0
    %710 = vmatprep.subr.mxu0 %v228
    %711 = vmatpush1.msra.mxu0 %v227
    %712 = vmatprep.subr.mxu0 %v226
    %713 = vmatpush1.msra.mxu0 %v225
    %714 = vmatprep.subr.mxu0 %v224
    %715 = vmatpush1.msra.mxu0 %v223
    %716 = vmatprep.subr.mxu0 %v222
    %717 = vmatpush1.msra.mxu0 %v221
    %718 = vmatprep.subr.mxu0 %v220
    %719 = vmatpush1.msra.mxu0 %v219
    %720 = vmatprep.subr.mxu0 %v218
    %721 = vmatpush1.msra.mxu0 %v217
    %722 = vmatprep.subr.mxu0 %v216
    %723 = vmatpush1.msra.mxu0 %v215
    %724 = vmatprep.subr.mxu0 %v214
    %725 = vmatpush1.msra.mxu0 %v213
    %726 = vmatprep.subr.mxu0 0.0
    %727 = vmatpush2.msra.mxu0 0.0
    %728 = vmatprep.subr.mxu0 0.0
    %729 = vmatpush2.msra.mxu0 0.0
    %730 = vmatprep.subr.mxu0 0.0
    %731 = vmatpush2.msra.mxu0 0.0
    %732 = vmatprep.subr.mxu0 0.0
    %733 = vmatpush2.msra.mxu0 0.0
    %734 = vmatprep.subr.mxu0 0.0
    %735 = vmatpush2.msra.mxu0 0.0
    %736 = vmatprep.subr.mxu0 0.0
    %737 = vmatpush2.msra.mxu0 0.0
    %738 = vmatprep.subr.mxu0 0.0
    %739 = vmatpush2.msra.mxu0 0.0
    %740 = vmatprep.subr.mxu0 0.0
    %741 = vmatpush2.msra.mxu0 0.0
    %742 = vmatprep.subr.mxu0 0.0
    %743 = vmatpush2.msra.mxu0 0.0
    %744 = vmatprep.subr.mxu0 0.0
    %745 = vmatpush2.msra.mxu0 0.0
    %746 = vmatprep.subr.mxu0 0.0
    %747 = vmatpush2.msra.mxu0 0.0
    %748 = vmatprep.subr.mxu0 0.0
    %749 = vmatpush2.msra.mxu0 0.0
    %750 = vmatprep.subr.mxu0 0.0
    %751 = vmatpush2.msra.mxu0 0.0
    %752 = vmatprep.subr.mxu0 0.0
    %753 = vmatpush2.msra.mxu0 0.0
    %754 = vmatprep.subr.mxu0 0.0
    %755 = vmatpush2.msra.mxu0 0.0
    %756 = vmatprep.subr.mxu0 0.0
    %757 = vmatpush2.msra.mxu0 0.0
    %758 = vmatprep.mubr.f32.mxu0 0.0
    %759 = vmatmul.mubr.f32.gmra.mxu0 %v692
    %v760 = vpop.f32.mrf.mxu0
    %v761 = vadd.f32 0.0, %v760
    %v762 = vpop.f32.mrf.mxu0
    %v763 = vadd.f32 0.0, %v762
    %764 = vdwg.mxu0
    %s765 = scalar_lea.vmem [#allocation2], 24
    %v766 = vld [vmem:[%s765] sm:$0xff]
    %s767 = scalar_lea.vmem [#allocation3], 32
    %v768 = vld [vmem:[%s767] sm:$0xff]
    %v769 = vadd.f32 %v766, %v761
    %v770 = vxor.u32 %v769, 2147483648
    %v771 = vmul.f32 %v770, 1.442695
    %v772 = vpow.pop %v771
    %v773 = vadd.f32 %v772, 1.0
    %v774 = vrcp.pop %v773
    %v775 = vmul.f32 1.0, %v774
    %v776 = vadd.f32 %v761, %v321
    %778 = vrot.lane.b32.xlu0 %v776, 64
    %v779 = vpop.permute.xlu0 %778
    %v781 = vmul.f32 %v775, %v779
    %783 = vrot.lane.b32.xlu0 %v781, 64
    %v784 = vpop.permute.xlu0 %783
    %v786 = vadd.f32 %v766, %v784
    %v787 = vtanh.pop %v786
    %789 = vrot.lane.b32.xlu0 %v787, 64
    %v790 = vpop.permute.xlu0 %789
    %v792 = vsub.f32 %v690, %v790
    %794 = vrot.lane.b32.xlu0 %v792, 32
    %v795 = vpop.permute.xlu0 %794
    %v797 = vmul.f32 %v775, %v795
    %799 = vrot.lane.b32.xlu0 %v797, 32
    %v800 = vpop.permute.xlu0 %799
    %v802 = vadd.f32 %v787, %v800
    %v803 = vadd.f32 %v768, %v763
    %v804 = vxor.u32 %v803, 2147483648
    %v805 = vmul.f32 %v804, 1.442695
    %v806 = vpow.pop %v805
    %v807 = vadd.f32 %v806, 1.0
    %v808 = vrcp.pop %v807
    %v809 = vmul.f32 1.0, %v808
    %v810 = vadd.f32 %v763, %v354
    %812 = vrot.lane.b32.xlu0 %v810, 64
    %v813 = vpop.permute.xlu0 %812
    %v815 = vmul.f32 %v809, %v813
    %817 = vrot.lane.b32.xlu0 %v815, 64
    %v818 = vpop.permute.xlu0 %817
    %v820 = vadd.f32 %v768, %v818
    %v821 = vtanh.pop %v820
    %823 = vrot.lane.b32.xlu0 %v821, 96
    %v824 = vpop.permute.xlu0 %823
    %v826 = vsub.f32 %v690, %v824
    %v827 = vmul.f32 %v809, %v826
    %829 = vrot.lane.b32.xlu0 %v827, 32
    %v830 = vpop.permute.xlu0 %829
    %v832 = vadd.f32 %v821, %v830
    %834 = vrot.lane.b32.xlu0 %v802, 64
    %v835 = vpop.permute.xlu0 %834
    %838 = vrot.lane.b32.xlu0 %v832, 96
    %v839 = vpop.permute.xlu0 %838
    %v841 = vsel %vm387, %v835, %v839
    %v843 = vsel %vm235, %v841, 0
    %845 = vmatprep.subr.mxu0 0.0
    %846 = vmatpush1.msra.mxu0 0.0
    %847 = vmatprep.subr.mxu0 0.0
    %848 = vmatpush1.msra.mxu0 0.0
    %849 = vmatprep.subr.mxu0 0.0
    %850 = vmatpush1.msra.mxu0 0.0
    %851 = vmatprep.subr.mxu0 0.0
    %852 = vmatpush1.msra.mxu0 0.0
    %853 = vmatprep.subr.mxu0 0.0
    %854 = vmatpush1.msra.mxu0 0.0
    %855 = vmatprep.subr.mxu0 0.0
    %856 = vmatpush1.msra.mxu0 0.0
    %857 = vmatprep.subr.mxu0 0.0
    %858 = vmatpush1.msra.mxu0 0.0
    %859 = vmatprep.subr.mxu0 0.0
    %860 = vmatpush1.msra.mxu0 0.0
    %861 = vmatprep.subr.mxu0 %v228
    %862 = vmatpush1.msra.mxu0 %v227
    %863 = vmatprep.subr.mxu0 %v226
    %864 = vmatpush1.msra.mxu0 %v225
    %865 = vmatprep.subr.mxu0 %v224
    %866 = vmatpush1.msra.mxu0 %v223
    %867 = vmatprep.subr.mxu0 %v222
    %868 = vmatpush1.msra.mxu0 %v221
    %869 = vmatprep.subr.mxu0 %v220
    %870 = vmatpush1.msra.mxu0 %v219
    %871 = vmatprep.subr.mxu0 %v218
    %872 = vmatpush1.msra.mxu0 %v217
    %873 = vmatprep.subr.mxu0 %v216
    %874 = vmatpush1.msra.mxu0 %v215
    %875 = vmatprep.subr.mxu0 %v214
    %876 = vmatpush1.msra.mxu0 %v213
    %877 = vmatprep.subr.mxu0 0.0
    %878 = vmatpush2.msra.mxu0 0.0
    %879 = vmatprep.subr.mxu0 0.0
    %880 = vmatpush2.msra.mxu0 0.0
    %881 = vmatprep.subr.mxu0 0.0
    %882 = vmatpush2.msra.mxu0 0.0
    %883 = vmatprep.subr.mxu0 0.0
    %884 = vmatpush2.msra.mxu0 0.0
    %885 = vmatprep.subr.mxu0 0.0
    %886 = vmatpush2.msra.mxu0 0.0
    %887 = vmatprep.subr.mxu0 0.0
    %888 = vmatpush2.msra.mxu0 0.0
    %889 = vmatprep.subr.mxu0 0.0
    %890 = vmatpush2.msra.mxu0 0.0
    %891 = vmatprep.subr.mxu0 0.0
    %892 = vmatpush2.msra.mxu0 0.0
    %893 = vmatprep.subr.mxu0 0.0
    %894 = vmatpush2.msra.mxu0 0.0
    %895 = vmatprep.subr.mxu0 0.0
    %896 = vmatpush2.msra.mxu0 0.0
    %897 = vmatprep.subr.mxu0 0.0
    %898 = vmatpush2.msra.mxu0 0.0
    %899 = vmatprep.subr.mxu0 0.0
    %900 = vmatpush2.msra.mxu0 0.0
    %901 = vmatprep.subr.mxu0 0.0
    %902 = vmatpush2.msra.mxu0 0.0
    %903 = vmatprep.subr.mxu0 0.0
    %904 = vmatpush2.msra.mxu0 0.0
    %905 = vmatprep.subr.mxu0 0.0
    %906 = vmatpush2.msra.mxu0 0.0
    %907 = vmatprep.subr.mxu0 0.0
    %908 = vmatpush2.msra.mxu0 0.0
    %909 = vmatprep.mubr.f32.mxu0 0.0
    %910 = vmatmul.mubr.f32.gmra.mxu0 %v843
    %v911 = vpop.f32.mrf.mxu0
    %v912 = vadd.f32 0.0, %v911
    %v913 = vpop.f32.mrf.mxu0
    %v914 = vadd.f32 0.0, %v913
    %915 = vdwg.mxu0
    %s916 = scalar_lea.vmem [#allocation2], 32
    %v917 = vld [vmem:[%s916] sm:$0xff]
    %s918 = scalar_lea.vmem [#allocation3], 24
    %v919 = vld [vmem:[%s918] sm:$0xff]
    %v920 = vadd.f32 %v917, %v912
    %v921 = vxor.u32 %v920, 2147483648
    %v922 = vmul.f32 %v921, 1.442695
    %v923 = vpow.pop %v922
    %v924 = vadd.f32 %v923, 1.0
    %v925 = vrcp.pop %v924
    %v926 = vmul.f32 1.0, %v925
    %v927 = vadd.f32 %v912, %v321
    %929 = vrot.lane.b32.xlu0 %v927, 64
    %v930 = vpop.permute.xlu0 %929
    %v932 = vmul.f32 %v926, %v930
    %934 = vrot.lane.b32.xlu0 %v932, 64
    %v935 = vpop.permute.xlu0 %934
    %v937 = vadd.f32 %v917, %v935
    %v938 = vtanh.pop %v937
    %940 = vrot.lane.b32.xlu0 %v938, 64
    %v941 = vpop.permute.xlu0 %940
    %v943 = vsub.f32 %v841, %v941
    %945 = vrot.lane.b32.xlu0 %v943, 32
    %v946 = vpop.permute.xlu0 %945
    %v948 = vmul.f32 %v926, %v946
    %950 = vrot.lane.b32.xlu0 %v948, 32
    %v951 = vpop.permute.xlu0 %950
    %v953 = vadd.f32 %v938, %v951
    %v954 = vadd.f32 %v919, %v914
    %v955 = vxor.u32 %v954, 2147483648
    %v956 = vmul.f32 %v955, 1.442695
    %v957 = vpow.pop %v956
    %v958 = vadd.f32 %v957, 1.0
    %v959 = vrcp.pop %v958
    %v960 = vmul.f32 1.0, %v959
    %v961 = vadd.f32 %v914, %v354
    %963 = vrot.lane.b32.xlu0 %v961, 64
    %v964 = vpop.permute.xlu0 %963
    %v966 = vmul.f32 %v960, %v964
    %968 = vrot.lane.b32.xlu0 %v966, 64
    %v969 = vpop.permute.xlu0 %968
    %v971 = vadd.f32 %v919, %v969
    %v972 = vtanh.pop %v971
    %974 = vrot.lane.b32.xlu0 %v972, 96
    %v975 = vpop.permute.xlu0 %974
    %v977 = vsub.f32 %v841, %v975
    %v978 = vmul.f32 %v960, %v977
    %980 = vrot.lane.b32.xlu0 %v978, 32
    %v981 = vpop.permute.xlu0 %980
    %v983 = vadd.f32 %v972, %v981
    %985 = vrot.lane.b32.xlu0 %v953, 64
    %v986 = vpop.permute.xlu0 %985
    %989 = vrot.lane.b32.xlu0 %v983, 96
    %v990 = vpop.permute.xlu0 %989
    %v992 = vsel %vm387, %v986, %v990
    %v994 = vsel %vm235, %v992, 0
    %996 = vmatprep.subr.mxu0 0.0
    %997 = vmatpush1.msra.mxu0 0.0
    %998 = vmatprep.subr.mxu0 0.0
    %999 = vmatpush1.msra.mxu0 0.0
    %1000 = vmatprep.subr.mxu0 0.0
    %1001 = vmatpush1.msra.mxu0 0.0
    %1002 = vmatprep.subr.mxu0 0.0
    %1003 = vmatpush1.msra.mxu0 0.0
    %1004 = vmatprep.subr.mxu0 0.0
    %1005 = vmatpush1.msra.mxu0 0.0
    %1006 = vmatprep.subr.mxu0 0.0
    %1007 = vmatpush1.msra.mxu0 0.0
    %1008 = vmatprep.subr.mxu0 0.0
    %1009 = vmatpush1.msra.mxu0 0.0
    %1010 = vmatprep.subr.mxu0 0.0
    %1011 = vmatpush1.msra.mxu0 0.0
    %1012 = vmatprep.subr.mxu0 %v228
    %1013 = vmatpush1.msra.mxu0 %v227
    %1014 = vmatprep.subr.mxu0 %v226
    %1015 = vmatpush1.msra.mxu0 %v225
    %1016 = vmatprep.subr.mxu0 %v224
    %1017 = vmatpush1.msra.mxu0 %v223
    %1018 = vmatprep.subr.mxu0 %v222
    %1019 = vmatpush1.msra.mxu0 %v221
    %1020 = vmatprep.subr.mxu0 %v220
    %1021 = vmatpush1.msra.mxu0 %v219
    %1022 = vmatprep.subr.mxu0 %v218
    %1023 = vmatpush1.msra.mxu0 %v217
    %1024 = vmatprep.subr.mxu0 %v216
    %1025 = vmatpush1.msra.mxu0 %v215
    %1026 = vmatprep.subr.mxu0 %v214
    %1027 = vmatpush1.msra.mxu0 %v213
    %1028 = vmatprep.subr.mxu0 0.0
    %1029 = vmatpush2.msra.mxu0 0.0
    %1030 = vmatprep.subr.mxu0 0.0
    %1031 = vmatpush2.msra.mxu0 0.0
    %1032 = vmatprep.subr.mxu0 0.0
    %1033 = vmatpush2.msra.mxu0 0.0
    %1034 = vmatprep.subr.mxu0 0.0
    %1035 = vmatpush2.msra.mxu0 0.0
    %1036 = vmatprep.subr.mxu0 0.0
    %1037 = vmatpush2.msra.mxu0 0.0
    %1038 = vmatprep.subr.mxu0 0.0
    %1039 = vmatpush2.msra.mxu0 0.0
    %1040 = vmatprep.subr.mxu0 0.0
    %1041 = vmatpush2.msra.mxu0 0.0
    %1042 = vmatprep.subr.mxu0 0.0
    %1043 = vmatpush2.msra.mxu0 0.0
    %1044 = vmatprep.subr.mxu0 0.0
    %1045 = vmatpush2.msra.mxu0 0.0
    %1046 = vmatprep.subr.mxu0 0.0
    %1047 = vmatpush2.msra.mxu0 0.0
    %1048 = vmatprep.subr.mxu0 0.0
    %1049 = vmatpush2.msra.mxu0 0.0
    %1050 = vmatprep.subr.mxu0 0.0
    %1051 = vmatpush2.msra.mxu0 0.0
    %1052 = vmatprep.subr.mxu0 0.0
    %1053 = vmatpush2.msra.mxu0 0.0
    %1054 = vmatprep.subr.mxu0 0.0
    %1055 = vmatpush2.msra.mxu0 0.0
    %1056 = vmatprep.subr.mxu0 0.0
    %1057 = vmatpush2.msra.mxu0 0.0
    %1058 = vmatprep.subr.mxu0 0.0
    %1059 = vmatpush2.msra.mxu0 0.0
    %1060 = vmatprep.mubr.f32.mxu0 0.0
    %1061 = vmatmul.mubr.f32.gmra.mxu0 %v994
    %v1062 = vpop.f32.mrf.mxu0
    %v1063 = vadd.f32 0.0, %v1062
    %v1064 = vpop.f32.mrf.mxu0
    %v1065 = vadd.f32 0.0, %v1064
    %1066 = vdwg.mxu0
    %s1067 = scalar_lea.vmem [#allocation2], 40
    %v1068 = vld [vmem:[%s1067] sm:$0xff]
    %s1069 = scalar_lea.vmem [#allocation3], 16
    %v1070 = vld [vmem:[%s1069] sm:$0xff]
    %v1071 = vadd.f32 %v1068, %v1063
    %v1072 = vxor.u32 %v1071, 2147483648
    %v1073 = vmul.f32 %v1072, 1.442695
    %v1074 = vpow.pop %v1073
    %v1075 = vadd.f32 %v1074, 1.0
    %v1076 = vrcp.pop %v1075
    %v1077 = vmul.f32 1.0, %v1076
    %v1078 = vadd.f32 %v1063, %v321
    %1080 = vrot.lane.b32.xlu0 %v1078, 64
    %v1081 = vpop.permute.xlu0 %1080
    %v1083 = vmul.f32 %v1077, %v1081
    %1085 = vrot.lane.b32.xlu0 %v1083, 64
    %v1086 = vpop.permute.xlu0 %1085
    %v1088 = vadd.f32 %v1068, %v1086
    %v1089 = vtanh.pop %v1088
    %1091 = vrot.lane.b32.xlu0 %v1089, 64
    %v1092 = vpop.permute.xlu0 %1091
    %v1094 = vsub.f32 %v992, %v1092
    %1096 = vrot.lane.b32.xlu0 %v1094, 32
    %v1097 = vpop.permute.xlu0 %1096
    %v1099 = vmul.f32 %v1077, %v1097
    %1101 = vrot.lane.b32.xlu0 %v1099, 32
    %v1102 = vpop.permute.xlu0 %1101
    %v1104 = vadd.f32 %v1089, %v1102
    %v1105 = vadd.f32 %v1070, %v1065
    %v1106 = vxor.u32 %v1105, 2147483648
    %v1107 = vmul.f32 %v1106, 1.442695
    %v1108 = vpow.pop %v1107
    %v1109 = vadd.f32 %v1108, 1.0
    %v1110 = vrcp.pop %v1109
    %v1111 = vmul.f32 1.0, %v1110
    %v1112 = vadd.f32 %v1065, %v354
    %1114 = vrot.lane.b32.xlu0 %v1112, 64
    %v1115 = vpop.permute.xlu0 %1114
    %v1117 = vmul.f32 %v1111, %v1115
    %1119 = vrot.lane.b32.xlu0 %v1117, 64
    %v1120 = vpop.permute.xlu0 %1119
    %v1122 = vadd.f32 %v1070, %v1120
    %v1123 = vtanh.pop %v1122
    %1125 = vrot.lane.b32.xlu0 %v1123, 96
    %v1126 = vpop.permute.xlu0 %1125
    %v1128 = vsub.f32 %v992, %v1126
    %v1129 = vmul.f32 %v1111, %v1128
    %1131 = vrot.lane.b32.xlu0 %v1129, 32
    %v1132 = vpop.permute.xlu0 %1131
    %v1134 = vadd.f32 %v1123, %v1132
    %1136 = vrot.lane.b32.xlu0 %v1104, 64
    %v1137 = vpop.permute.xlu0 %1136
    %1140 = vrot.lane.b32.xlu0 %v1134, 96
    %v1141 = vpop.permute.xlu0 %1140
    %v1143 = vsel %vm387, %v1137, %v1141
    %v1145 = vsel %vm235, %v1143, 0
    %1147 = vmatprep.subr.mxu0 0.0
    %1148 = vmatpush1.msra.mxu0 0.0
    %1149 = vmatprep.subr.mxu0 0.0
    %1150 = vmatpush1.msra.mxu0 0.0
    %1151 = vmatprep.subr.mxu0 0.0
    %1152 = vmatpush1.msra.mxu0 0.0
    %1153 = vmatprep.subr.mxu0 0.0
    %1154 = vmatpush1.msra.mxu0 0.0
    %1155 = vmatprep.subr.mxu0 0.0
    %1156 = vmatpush1.msra.mxu0 0.0
    %1157 = vmatprep.subr.mxu0 0.0
    %1158 = vmatpush1.msra.mxu0 0.0
    %1159 = vmatprep.subr.mxu0 0.0
    %1160 = vmatpush1.msra.mxu0 0.0
    %1161 = vmatprep.subr.mxu0 0.0
    %1162 = vmatpush1.msra.mxu0 0.0
    %1163 = vmatprep.subr.mxu0 %v228
    %1164 = vmatpush1.msra.mxu0 %v227
    %1165 = vmatprep.subr.mxu0 %v226
    %1166 = vmatpush1.msra.mxu0 %v225
    %1167 = vmatprep.subr.mxu0 %v224
    %1168 = vmatpush1.msra.mxu0 %v223
    %1169 = vmatprep.subr.mxu0 %v222
    %1170 = vmatpush1.msra.mxu0 %v221
    %1171 = vmatprep.subr.mxu0 %v220
    %1172 = vmatpush1.msra.mxu0 %v219
    %1173 = vmatprep.subr.mxu0 %v218
    %1174 = vmatpush1.msra.mxu0 %v217
    %1175 = vmatprep.subr.mxu0 %v216
    %1176 = vmatpush1.msra.mxu0 %v215
    %1177 = vmatprep.subr.mxu0 %v214
    %1178 = vmatpush1.msra.mxu0 %v213
    %1179 = vmatprep.subr.mxu0 0.0
    %1180 = vmatpush2.msra.mxu0 0.0
    %1181 = vmatprep.subr.mxu0 0.0
    %1182 = vmatpush2.msra.mxu0 0.0
    %1183 = vmatprep.subr.mxu0 0.0
    %1184 = vmatpush2.msra.mxu0 0.0
    %1185 = vmatprep.subr.mxu0 0.0
    %1186 = vmatpush2.msra.mxu0 0.0
    %1187 = vmatprep.subr.mxu0 0.0
    %1188 = vmatpush2.msra.mxu0 0.0
    %1189 = vmatprep.subr.mxu0 0.0
    %1190 = vmatpush2.msra.mxu0 0.0
    %1191 = vmatprep.subr.mxu0 0.0
    %1192 = vmatpush2.msra.mxu0 0.0
    %1193 = vmatprep.subr.mxu0 0.0
    %1194 = vmatpush2.msra.mxu0 0.0
    %1195 = vmatprep.subr.mxu0 0.0
    %1196 = vmatpush2.msra.mxu0 0.0
    %1197 = vmatprep.subr.mxu0 0.0
    %1198 = vmatpush2.msra.mxu0 0.0
    %1199 = vmatprep.subr.mxu0 0.0
    %1200 = vmatpush2.msra.mxu0 0.0
    %1201 = vmatprep.subr.mxu0 0.0
    %1202 = vmatpush2.msra.mxu0 0.0
    %1203 = vmatprep.subr.mxu0 0.0
    %1204 = vmatpush2.msra.mxu0 0.0
    %1205 = vmatprep.subr.mxu0 0.0
    %1206 = vmatpush2.msra.mxu0 0.0
    %1207 = vmatprep.subr.mxu0 0.0
    %1208 = vmatpush2.msra.mxu0 0.0
    %1209 = vmatprep.subr.mxu0 0.0
    %1210 = vmatpush2.msra.mxu0 0.0
    %1211 = vmatprep.mubr.f32.mxu0 0.0
    %1212 = vmatmul.mubr.f32.gmra.mxu0 %v1145
    %v1213 = vpop.f32.mrf.mxu0
    %v1214 = vadd.f32 0.0, %v1213
    %v1215 = vpop.f32.mrf.mxu0
    %v1216 = vadd.f32 0.0, %v1215
    %1217 = vdwg.mxu0
    %s1218 = scalar_lea.vmem [#allocation2], 48
    %v1219 = vld [vmem:[%s1218] sm:$0xff]
    %s1220 = scalar_lea.vmem [#allocation3], 8
    %v1221 = vld [vmem:[%s1220] sm:$0xff]
    %v1222 = vadd.f32 %v1219, %v1214
    %v1223 = vxor.u32 %v1222, 2147483648
    %v1224 = vmul.f32 %v1223, 1.442695
    %v1225 = vpow.pop %v1224
    %v1226 = vadd.f32 %v1225, 1.0
    %v1227 = vrcp.pop %v1226
    %v1228 = vmul.f32 1.0, %v1227
    %v1229 = vadd.f32 %v1214, %v321
    %1231 = vrot.lane.b32.xlu0 %v1229, 64
    %v1232 = vpop.permute.xlu0 %1231
    %v1234 = vmul.f32 %v1228, %v1232
    %1236 = vrot.lane.b32.xlu0 %v1234, 64
    %v1237 = vpop.permute.xlu0 %1236
    %v1239 = vadd.f32 %v1219, %v1237
    %v1240 = vtanh.pop %v1239
    %1242 = vrot.lane.b32.xlu0 %v1240, 64
    %v1243 = vpop.permute.xlu0 %1242
    %v1245 = vsub.f32 %v1143, %v1243
    %1247 = vrot.lane.b32.xlu0 %v1245, 32
    %v1248 = vpop.permute.xlu0 %1247
    %v1250 = vmul.f32 %v1228, %v1248
    %1252 = vrot.lane.b32.xlu0 %v1250, 32
    %v1253 = vpop.permute.xlu0 %1252
    %v1255 = vadd.f32 %v1240, %v1253
    %v1256 = vadd.f32 %v1221, %v1216
    %v1257 = vxor.u32 %v1256, 2147483648
    %v1258 = vmul.f32 %v1257, 1.442695
    %v1259 = vpow.pop %v1258
    %v1260 = vadd.f32 %v1259, 1.0
    %v1261 = vrcp.pop %v1260
    %v1262 = vmul.f32 1.0, %v1261
    %v1263 = vadd.f32 %v1216, %v354
    %1265 = vrot.lane.b32.xlu0 %v1263, 64
    %v1266 = vpop.permute.xlu0 %1265
    %v1268 = vmul.f32 %v1262, %v1266
    %1270 = vrot.lane.b32.xlu0 %v1268, 64
    %v1271 = vpop.permute.xlu0 %1270
    %v1273 = vadd.f32 %v1221, %v1271
    %v1274 = vtanh.pop %v1273
    %1276 = vrot.lane.b32.xlu0 %v1274, 96
    %v1277 = vpop.permute.xlu0 %1276
    %v1279 = vsub.f32 %v1143, %v1277
    %v1280 = vmul.f32 %v1262, %v1279
    %1282 = vrot.lane.b32.xlu0 %v1280, 32
    %v1283 = vpop.permute.xlu0 %1282
    %v1285 = vadd.f32 %v1274, %v1283
    %1287 = vrot.lane.b32.xlu0 %v1255, 64
    %v1288 = vpop.permute.xlu0 %1287
    %1291 = vrot.lane.b32.xlu0 %v1285, 96
    %v1292 = vpop.permute.xlu0 %1291
    %v1294 = vsel %vm387, %v1288, %v1292
    %v1296 = vsel %vm235, %v1294, 0
    %1298 = vmatprep.subr.mxu0 0.0
    %1299 = vmatpush1.msra.mxu0 0.0
    %1300 = vmatprep.subr.mxu0 0.0
    %1301 = vmatpush1.msra.mxu0 0.0
    %1302 = vmatprep.subr.mxu0 0.0
    %1303 = vmatpush1.msra.mxu0 0.0
    %1304 = vmatprep.subr.mxu0 0.0
    %1305 = vmatpush1.msra.mxu0 0.0
    %1306 = vmatprep.subr.mxu0 0.0
    %1307 = vmatpush1.msra.mxu0 0.0
    %1308 = vmatprep.subr.mxu0 0.0
    %1309 = vmatpush1.msra.mxu0 0.0
    %1310 = vmatprep.subr.mxu0 0.0
    %1311 = vmatpush1.msra.mxu0 0.0
    %1312 = vmatprep.subr.mxu0 0.0
    %1313 = vmatpush1.msra.mxu0 0.0
    %1314 = vmatprep.subr.mxu0 %v228
    %1315 = vmatpush1.msra.mxu0 %v227
    %1316 = vmatprep.subr.mxu0 %v226
    %1317 = vmatpush1.msra.mxu0 %v225
    %1318 = vmatprep.subr.mxu0 %v224
    %1319 = vmatpush1.msra.mxu0 %v223
    %1320 = vmatprep.subr.mxu0 %v222
    %1321 = vmatpush1.msra.mxu0 %v221
    %1322 = vmatprep.subr.mxu0 %v220
    %1323 = vmatpush1.msra.mxu0 %v219
    %1324 = vmatprep.subr.mxu0 %v218
    %1325 = vmatpush1.msra.mxu0 %v217
    %1326 = vmatprep.subr.mxu0 %v216
    %1327 = vmatpush1.msra.mxu0 %v215
    %1328 = vmatprep.subr.mxu0 %v214
    %1329 = vmatpush1.msra.mxu0 %v213
    %1330 = vmatprep.subr.mxu0 0.0
    %1331 = vmatpush2.msra.mxu0 0.0
    %1332 = vmatprep.subr.mxu0 0.0
    %1333 = vmatpush2.msra.mxu0 0.0
    %1334 = vmatprep.subr.mxu0 0.0
    %1335 = vmatpush2.msra.mxu0 0.0
    %1336 = vmatprep.subr.mxu0 0.0
    %1337 = vmatpush2.msra.mxu0 0.0
    %1338 = vmatprep.subr.mxu0 0.0
    %1339 = vmatpush2.msra.mxu0 0.0
    %1340 = vmatprep.subr.mxu0 0.0
    %1341 = vmatpush2.msra.mxu0 0.0
    %1342 = vmatprep.subr.mxu0 0.0
    %1343 = vmatpush2.msra.mxu0 0.0
    %1344 = vmatprep.subr.mxu0 0.0
    %1345 = vmatpush2.msra.mxu0 0.0
    %1346 = vmatprep.subr.mxu0 0.0
    %1347 = vmatpush2.msra.mxu0 0.0
    %1348 = vmatprep.subr.mxu0 0.0
    %1349 = vmatpush2.msra.mxu0 0.0
    %1350 = vmatprep.subr.mxu0 0.0
    %1351 = vmatpush2.msra.mxu0 0.0
    %1352 = vmatprep.subr.mxu0 0.0
    %1353 = vmatpush2.msra.mxu0 0.0
    %1354 = vmatprep.subr.mxu0 0.0
    %1355 = vmatpush2.msra.mxu0 0.0
    %1356 = vmatprep.subr.mxu0 0.0
    %1357 = vmatpush2.msra.mxu0 0.0
    %1358 = vmatprep.subr.mxu0 0.0
    %1359 = vmatpush2.msra.mxu0 0.0
    %1360 = vmatprep.subr.mxu0 0.0
    %1361 = vmatpush2.msra.mxu0 0.0
    %1362 = vmatprep.mubr.f32.mxu0 0.0
    %1363 = vmatmul.mubr.f32.gmra.mxu0 %v1296
    %v1364 = vpop.f32.mrf.mxu0
    %v1365 = vadd.f32 0.0, %v1364
    %v1366 = vpop.f32.mrf.mxu0
    %v1367 = vadd.f32 0.0, %v1366
    %1368 = vdwg.mxu0
    %s1369 = scalar_lea.vmem [#allocation2], 56
    %v1370 = vld [vmem:[%s1369] sm:$0xff]
    %v1371 = vld [vmem:[#allocation3] sm:$0xff]
    %v1372 = vadd.f32 %v1370, %v1365
    %v1373 = vxor.u32 %v1372, 2147483648
    %v1374 = vmul.f32 %v1373, 1.442695
    %v1375 = vpow.pop %v1374
    %v1376 = vadd.f32 %v1375, 1.0
    %v1377 = vrcp.pop %v1376
    %v1378 = vmul.f32 1.0, %v1377
    %v1379 = vadd.f32 %v1365, %v321
    %1381 = vrot.lane.b32.xlu0 %v1379, 64
    %v1382 = vpop.permute.xlu0 %1381
    %v1384 = vmul.f32 %v1378, %v1382
    %1386 = vrot.lane.b32.xlu0 %v1384, 64
    %v1387 = vpop.permute.xlu0 %1386
    %v1389 = vadd.f32 %v1370, %v1387
    %v1390 = vtanh.pop %v1389
    %1392 = vrot.lane.b32.xlu0 %v1390, 64
    %v1393 = vpop.permute.xlu0 %1392
    %v1395 = vsub.f32 %v1294, %v1393
    %1397 = vrot.lane.b32.xlu0 %v1395, 32
    %v1398 = vpop.permute.xlu0 %1397
    %v1400 = vmul.f32 %v1378, %v1398
    %1402 = vrot.lane.b32.xlu0 %v1400, 32
    %v1403 = vpop.permute.xlu0 %1402
    %v1405 = vadd.f32 %v1390, %v1403
    %v1406 = vadd.f32 %v1371, %v1367
    %v1407 = vxor.u32 %v1406, 2147483648
    %v1408 = vmul.f32 %v1407, 1.442695
    %v1409 = vpow.pop %v1408
    %v1410 = vadd.f32 %v1409, 1.0
    %v1411 = vrcp.pop %v1410
    %v1412 = vmul.f32 1.0, %v1411
    %v1413 = vadd.f32 %v1367, %v354
    %1415 = vrot.lane.b32.xlu0 %v1413, 64
    %v1416 = vpop.permute.xlu0 %1415
    %v1418 = vmul.f32 %v1412, %v1416
    %1420 = vrot.lane.b32.xlu0 %v1418, 64
    %v1421 = vpop.permute.xlu0 %1420
    %v1423 = vadd.f32 %v1371, %v1421
    %v1424 = vtanh.pop %v1423
    %1426 = vrot.lane.b32.xlu0 %v1424, 96
    %v1427 = vpop.permute.xlu0 %1426
    %v1429 = vsub.f32 %v1294, %v1427
    %v1430 = vmul.f32 %v1412, %v1429
    %1432 = vrot.lane.b32.xlu0 %v1430, 32
    %v1433 = vpop.permute.xlu0 %1432
    %v1435 = vadd.f32 %v1424, %v1433
    %1437 = vrot.lane.b32.xlu0 %v1405, 64
    %v1438 = vpop.permute.xlu0 %1437
    %1441 = vrot.lane.b32.xlu0 %v1435, 96
    %v1442 = vpop.permute.xlu0 %1441
    %v1444 = vsel %vm387, %v1438, %v1442
    %1445 = vst.msk [vmem:[#allocation7] sm:$0xff] %vm387, %v1444
    %1447 = vrot.lane.b32.xlu0 %v1444, 96
    %v1448 = vpop.permute.xlu0 %1447
    %s1450 = scalar_lea.vmem [#allocation7], 8
    %1451 = vst.msk [vmem:[%s1450] sm:$0xff] %vm387, %v1448
    // Predicated region
    $region26: #{tpu_custom_call.1} parent=1 // pred_check
      _
    $region27: #{tpu_custom_call.1} parent=1 // pred_check_branch
      %1453 = sbr.rel (0) target = $region29
    $region28: #{tpu_custom_call.1} parent=1 // pred_region
      %s1455 = ssub.s32 256, 256
      %1456 = vsyncadd [#allocation6], %s1455
      %s1457 = sshll.u32 [#allocation7], 4
      %s1458 = int_to_ptr.vmem [resolvable:$true] %s1457
      %1463 = dma.vmem_to_hbm [thread:$0]  %s1458, 256, %s5, [#allocation6], 128, 128, 8
    $region29: #{tpu_custom_call.1} parent=1 // pred_fallthru
      _
    // Predicated region
    $region30: #{tpu_custom_call.1} parent=1 // pred_check
      _
    $region31: #{tpu_custom_call.1} parent=1 // pred_check_branch
      %1465 = sbr.rel (0) target = $region33
    $region32: #{tpu_custom_call.1} parent=1 // pred_region
      %1466 = dma.done [#allocation6], 256
    $region33: #{tpu_custom_call.1} parent=1 // pred_fallthru
      _
    %1467 = vsyncpa [#allocation5], 1
    %1468 = vsyncpa [#allocation6], 1

</llo_original>
